<compile_context>
chip_gen: v7x
topology: tpu7x:2x2x1
jax: 0.10.0
libtpu: 0.0.40
codegen_flags: <defaults>
</compile_context>

<pallas_src>
import functools

import jax
import jax.numpy as jnp
from jax.experimental import pallas as pl
from jax.experimental.pallas import tpu as pltpu


def _retain_kernel(B, T, E,
                   x_ref, mask_ref, attm_ref, pvalid_ref,
                   w_emb_ref,
                   w_ih_ref, w_hh_ref, b_ih_ref, b_hh_ref,
                   w_aatt_ref, b_aatt_ref, w_batt_ref, b_batt_ref,
                   w_fc_ref, b_fc_ref,
                   out_ref):
    f32 = jnp.float32
    E2, E4, E6 = 2 * E, 4 * E, 6 * E

    x2 = x_ref[...]            # [T*B, V]   time-major rows (t, b)
    mask3 = mask_ref[...]      # [T, B, 1]  1.0 where t < lengths[b]
    attm3 = attm_ref[...]      # [T, B, 1]  -99999.0 where t >= lengths[b]
    pvalid = pvalid_ref[...]   # [T*B, 1]   1.0 where t < max(lengths) - 1

    # ---- embedding (Linear, no bias): visit_emb = x @ W_emb^T ----
    ve2 = jnp.dot(x2, w_emb_ref[...], preferred_element_type=f32)      # [T*B, E]
    ve = ve2.reshape(T, B, E)

    # ---- fused input-side gate preactivations for BOTH GRUs at once ----
    # column layout everywhere: [r_a | r_b | z_a | z_b | n_a | n_b]
    xg = (jnp.dot(ve2, w_ih_ref[...], preferred_element_type=f32)
          + b_ih_ref[...]).reshape(T, B, E6)                            # [T, B, 6E]

    w_hh = w_hh_ref[...]       # [2E, 6E]  block-diagonal over (a | b)
    b_hh = b_hh_ref[...]       # [1, 6E]

    # ---- the two GRU recurrences fused into one (PyTorch gate order r,z,n),
    #      hidden init = 0, statically unrolled over T ----
    h = jnp.zeros((B, E2), f32)                   # [h_a | h_b]
    hs = []
    for t in range(T):
        gx = xg[t]                                                       # [B, 6E]
        gh = jnp.dot(h, w_hh, preferred_element_type=f32) + b_hh         # [B, 6E]
        r = jax.nn.sigmoid(gx[:, 0:E2] + gh[:, 0:E2])
        z = jax.nn.sigmoid(gx[:, E2:E4] + gh[:, E2:E4])
        n = jnp.tanh(gx[:, E4:E6] + r * gh[:, E4:E6])
        h = (1.0 - z) * n + z * h
        hs.append(h)
    hh = jnp.stack(hs, axis=0)                    # [T, B, 2E]

    # packed-sequence semantics: zero GRU outputs past each sample's length
    out_ab = hh * mask3                           # [T, B, 2E]
    out_a = out_ab[:, :, 0:E]
    out_b = out_ab[:, :, E:E2]

    # ---- attention score s_t = a_att(out_a)_t + att_mask  -> [T, B, 1] ----
    s3 = (jnp.sum(out_a * w_aatt_ref[...][None, :, :], axis=-1, keepdims=True)
          + b_aatt_ref[...] + attm3)

    # ---- beta = tanh(b_att(out_b)) ----
    beta = jnp.tanh(jnp.dot(out_b.reshape(T * B, E), w_batt_ref[...],
                            preferred_element_type=f32)
                    + b_batt_ref[...]).reshape(T, B, E)

    # term shared by every prefix: beta * visit_emb * mask
    u = beta * ve * mask3                         # [T, B, E]

    # ---- progressive attention: c_t = sum_{t'<=t} softmax_{t'<=t}(s)_{t'} u_{t'}
    # online prefix-softmax scan (running max / denom / numerator), O(T*E).
    # Even for a length-0 sample the first-step denominator is exp(0)=1, so no NaN.
    m = jnp.full((B, 1), -1e30, f32)
    den = jnp.zeros((B, 1), f32)
    num = jnp.zeros((B, E), f32)
    cs = []
    for t in range(T):
        s_t = s3[t]                               # [B, 1]
        m_new = jnp.maximum(m, s_t)
        scale = jnp.exp(m - m_new)
        p = jnp.exp(s_t - m_new)
        den = den * scale + p
        num = num * scale + p * u[t]
        m = m_new
        cs.append(num / den)
    # rows at t >= max(lengths) - 1 stay zero, exactly like the reference loop
    c2 = jnp.stack(cs, axis=0).reshape(T * B, E) * pvalid                # [T*B, E]

    # ---- fc + sigmoid (lane-dense, padded to 128 lanes; sliced in wrapper) ----
    logits = jnp.dot(c2, w_fc_ref[...], preferred_element_type=f32) + b_fc_ref[...]
    out_ref[...] = jax.nn.sigmoid(logits)                                # [T*B, Vp]


def retain_forward(input_visits, lengths, params):
    """code_probs = sigmoid(fc(progressive_c)), shape [B, T, V]."""
    B, T, V = input_visits.shape
    E = params["w_emb_t"].shape[1]
    Vp = ((V + 127) // 128) * 128         # lane-dense fc / output width
    f32 = jnp.float32

    # ---- masks (match the PyTorch reference exactly) ----
    t_idx = jnp.arange(T, dtype=jnp.int32)
    valid = t_idx[:, None] < lengths[None, :]                            # [T, B]
    mask3 = valid.astype(f32)[:, :, None]                                # [T, B, 1]
    attm3 = jnp.where(valid, 0.0, -99999.0).astype(f32)[:, :, None]      # [T, B, 1]
    true_len = jnp.max(lengths)
    pvalid_rows = jnp.repeat((t_idx < (true_len - 1)).astype(f32), B)[:, None]  # [T*B, 1]

    # time-major input rows (t, b)
    x2 = jnp.transpose(input_visits.astype(f32), (1, 0, 2)).reshape(T * B, V)

    # ---- fuse the two GRUs' parameters: columns [r_a|r_b|z_a|z_b|n_a|n_b] ----
    def fuse_cols(a, b):
        return jnp.concatenate([a[:, 0:E], b[:, 0:E],
                                a[:, E:2 * E], b[:, E:2 * E],
                                a[:, 2 * E:3 * E], b[:, 2 * E:3 * E]], axis=1)

    w_ih_f = fuse_cols(params["w_ih_a_t"], params["w_ih_b_t"])           # [E, 6E]
    b_ih_f = fuse_cols(params["b_ih_a"], params["b_ih_b"])               # [1, 6E]
    b_hh_f = fuse_cols(params["b_hh_a"], params["b_hh_b"])               # [1, 6E]
    zE = jnp.zeros((E, E), f32)
    wa, wb = params["w_hh_a_t"], params["w_hh_b_t"]
    w_hh_f = jnp.concatenate([
        jnp.concatenate([wa[:, 0:E], zE, wa[:, E:2 * E], zE, wa[:, 2 * E:3 * E], zE], axis=1),
        jnp.concatenate([zE, wb[:, 0:E], zE, wb[:, E:2 * E], zE, wb[:, 2 * E:3 * E]], axis=1),
    ], axis=0)                                                            # [2E, 6E]

    # pad the final projection to a lane-dense width (zero cols sliced off below)
    w_fc_p = jnp.zeros((E, Vp), f32).at[:, :V].set(params["w_fc_t"])
    b_fc_p = jnp.zeros((1, Vp), f32).at[:, :V].set(params["b_fc"])

    ins = (x2, mask3, attm3, pvalid_rows,
           params["w_emb_t"],
           w_ih_f, w_hh_f, b_ih_f, b_hh_f,
           params["w_aatt"], params["b_aatt"], params["w_batt_t"], params["b_batt"],
           w_fc_p, b_fc_p)

    kernel = functools.partial(_retain_kernel, B, T, E)
    out = pl.pallas_call(
        kernel,
        out_shape=jax.ShapeDtypeStruct((T * B, Vp), f32),
        in_specs=[pl.BlockSpec(memory_space=pltpu.MemorySpace.VMEM)] * len(ins),
        out_specs=pl.BlockSpec(memory_space=pltpu.MemorySpace.VMEM),
    )(*ins)

    # [T*B, Vp] (time-major) -> [B, T, V]
    return jnp.transpose(out.reshape(T, B, Vp), (1, 0, 2))[:, :, :V]


def init_params(key, V, E):
    """Deterministic synthetic parameters (PyTorch weights, pre-transposed)."""
    ks = jax.random.split(key, 15)
    s = 0.1

    def rn(k, shape):
        return jax.random.normal(k, shape, jnp.float32) * s

    return dict(
        w_emb_t=rn(ks[0], (V, E)),          # embedding.weight.T   [V, E]
        w_ih_a_t=rn(ks[1], (E, 3 * E)),     # a_rnn.weight_ih_l0.T
        w_hh_a_t=rn(ks[2], (E, 3 * E)),     # a_rnn.weight_hh_l0.T
        b_ih_a=rn(ks[3], (1, 3 * E)),
        b_hh_a=rn(ks[4], (1, 3 * E)),
        w_ih_b_t=rn(ks[5], (E, 3 * E)),     # b_rnn.weight_ih_l0.T
        w_hh_b_t=rn(ks[6], (E, 3 * E)),     # b_rnn.weight_hh_l0.T
        b_ih_b=rn(ks[7], (1, 3 * E)),
        b_hh_b=rn(ks[8], (1, 3 * E)),
        w_aatt=rn(ks[9], (1, E)),           # a_att.weight         [1, E]
        b_aatt=rn(ks[10], (1, 1)),
        w_batt_t=rn(ks[11], (E, E)),        # b_att.weight.T
        b_batt=rn(ks[12], (1, E)),
        w_fc_t=rn(ks[13], (E, V)),          # fc.weight.T
        b_fc=rn(ks[14], (1, V)),
    )


if __name__ == "__main__":
    B, T, V, E = 2, 8, 64, 32  # batch, seq, total_vocab_size, n_embd
    key = jax.random.PRNGKey(0)
    k_in, k_par = jax.random.split(key)

    input_visits = jax.random.bernoulli(k_in, 0.2, (B, T, V)).astype(jnp.float32)
    lengths = jnp.array([8, 5], dtype=jnp.int32)  # per-sample valid visit counts
    params = init_params(k_par, V, E)

    out = retain_forward(input_visits, lengths, params)
    jax.block_until_ready(out)
    assert out.shape == (B, T, V)
    print("KERNEL_OK")
</pallas_src>

<mosaic_0001>
module attributes {stable_mosaic.version = 11 : i64} {
  func.func @_retain_kernel(%arg0: memref<16x64xf32, #tpu.memory_space<vmem>>, %arg1: memref<8x2x1xf32, #tpu.memory_space<vmem>>, %arg2: memref<8x2x1xf32, #tpu.memory_space<vmem>>, %arg3: memref<16x1xf32, #tpu.memory_space<vmem>>, %arg4: memref<64x32xf32, #tpu.memory_space<vmem>>, %arg5: memref<32x192xf32, #tpu.memory_space<vmem>>, %arg6: memref<64x192xf32, #tpu.memory_space<vmem>>, %arg7: memref<1x192xf32, #tpu.memory_space<vmem>>, %arg8: memref<1x192xf32, #tpu.memory_space<vmem>>, %arg9: memref<1x32xf32, #tpu.memory_space<vmem>>, %arg10: memref<1x1xf32, #tpu.memory_space<vmem>>, %arg11: memref<32x32xf32, #tpu.memory_space<vmem>>, %arg12: memref<1x32xf32, #tpu.memory_space<vmem>>, %arg13: memref<32x128xf32, #tpu.memory_space<vmem>>, %arg14: memref<1x128xf32, #tpu.memory_space<vmem>>, %arg15: memref<16x128xf32, #tpu.memory_space<vmem>>) attributes {dimension_semantics = [], scalar_prefetch = 0 : i64, scratch_operands = 0 : i64, tpu.core_type = #tpu.core_type<tc>} {
    %c0 = arith.constant 0 : index
    %c0_0 = arith.constant 0 : index
    %0 = vector.load %arg0[%c0, %c0_0] : memref<16x64xf32, #tpu.memory_space<vmem>>, vector<16x64xf32>
    %c0_1 = arith.constant 0 : index
    %c0_2 = arith.constant 0 : index
    %c0_3 = arith.constant 0 : index
    %1 = vector.load %arg1[%c0_1, %c0_2, %c0_3] : memref<8x2x1xf32, #tpu.memory_space<vmem>>, vector<8x2x1xf32>
    %c0_4 = arith.constant 0 : index
    %c0_5 = arith.constant 0 : index
    %c0_6 = arith.constant 0 : index
    %2 = vector.load %arg2[%c0_4, %c0_5, %c0_6] : memref<8x2x1xf32, #tpu.memory_space<vmem>>, vector<8x2x1xf32>
    %c0_7 = arith.constant 0 : index
    %c0_8 = arith.constant 0 : index
    %3 = vector.load %arg3[%c0_7, %c0_8] : memref<16x1xf32, #tpu.memory_space<vmem>>, vector<16x1xf32>
    %c0_9 = arith.constant 0 : index
    %c0_10 = arith.constant 0 : index
    %4 = vector.load %arg4[%c0_9, %c0_10] : memref<64x32xf32, #tpu.memory_space<vmem>>, vector<64x32xf32>
    %cst = arith.constant dense<0.000000e+00> : vector<16x32xf32>
    %5 = tpu.matmul %0, %4, %cst {dimension_numbers = #tpu.dot_dimension_numbers<[1], [0], [0], [1], [0, 0, 1, 1], [], []>} : vector<16x64xf32>, vector<64x32xf32>, vector<16x32xf32> -> vector<16x32xf32>
    %6 = vector.shape_cast %5 : vector<16x32xf32> to vector<8x2x32xf32>
    %c0_11 = arith.constant 0 : index
    %c0_12 = arith.constant 0 : index
    %7 = vector.load %arg5[%c0_11, %c0_12] : memref<32x192xf32, #tpu.memory_space<vmem>>, vector<32x192xf32>
    %cst_13 = arith.constant dense<0.000000e+00> : vector<16x192xf32>
    %8 = tpu.matmul %5, %7, %cst_13 {dimension_numbers = #tpu.dot_dimension_numbers<[1], [0], [0], [1], [0, 0, 1, 1], [], []>} : vector<16x32xf32>, vector<32x192xf32>, vector<16x192xf32> -> vector<16x192xf32>
    %c0_14 = arith.constant 0 : index
    %c0_15 = arith.constant 0 : index
    %9 = vector.load %arg7[%c0_14, %c0_15] : memref<1x192xf32, #tpu.memory_space<vmem>>, vector<1x192xf32>
    %10 = vector.broadcast %9 : vector<1x192xf32> to vector<16x192xf32>
    %11 = arith.addf %8, %10 : vector<16x192xf32>
    %12 = vector.shape_cast %11 : vector<16x192xf32> to vector<8x2x192xf32>
    %c0_16 = arith.constant 0 : index
    %c0_17 = arith.constant 0 : index
    %13 = vector.load %arg6[%c0_16, %c0_17] : memref<64x192xf32, #tpu.memory_space<vmem>>, vector<64x192xf32>
    %c0_18 = arith.constant 0 : index
    %c0_19 = arith.constant 0 : index
    %14 = vector.load %arg8[%c0_18, %c0_19] : memref<1x192xf32, #tpu.memory_space<vmem>>, vector<1x192xf32>
    %cst_20 = arith.constant 0.000000e+00 : f32
    %15 = vector.broadcast %cst_20 : f32 to vector<2x64xf32>
    %16 = vector.extract_strided_slice %12 {offsets = [0, 0, 0], sizes = [1, 2, 192], strides = [1, 1, 1]} : vector<8x2x192xf32> to vector<1x2x192xf32>
    %17 = vector.shape_cast %16 : vector<1x2x192xf32> to vector<2x192xf32>
    %cst_21 = arith.constant dense<0.000000e+00> : vector<2x192xf32>
    %18 = tpu.matmul %15, %13, %cst_21 {dimension_numbers = #tpu.dot_dimension_numbers<[1], [0], [0], [1], [0, 0, 1, 1], [], []>} : vector<2x64xf32>, vector<64x192xf32>, vector<2x192xf32> -> vector<2x192xf32>
    %19 = vector.broadcast %14 : vector<1x192xf32> to vector<2x192xf32>
    %20 = arith.addf %18, %19 : vector<2x192xf32>
    %21 = vector.extract_strided_slice %17 {offsets = [0, 0], sizes = [2, 64], strides = [1, 1]} : vector<2x192xf32> to vector<2x64xf32>
    %22 = vector.extract_strided_slice %20 {offsets = [0, 0], sizes = [2, 64], strides = [1, 1]} : vector<2x192xf32> to vector<2x64xf32>
    %23 = arith.addf %21, %22 : vector<2x64xf32>
    %24 = arith.negf %23 : vector<2x64xf32>
    %25 = math.exp %24 : vector<2x64xf32>
    %cst_22 = arith.constant 1.000000e+00 : f32
    %26 = vector.broadcast %cst_22 : f32 to vector<2x64xf32>
    %27 = arith.addf %26, %25 : vector<2x64xf32>
    %28 = arith.divf %26, %27 : vector<2x64xf32>
    %29 = vector.extract_strided_slice %17 {offsets = [0, 64], sizes = [2, 64], strides = [1, 1]} : vector<2x192xf32> to vector<2x64xf32>
    %30 = vector.extract_strided_slice %20 {offsets = [0, 64], sizes = [2, 64], strides = [1, 1]} : vector<2x192xf32> to vector<2x64xf32>
    %31 = arith.addf %29, %30 : vector<2x64xf32>
    %32 = arith.negf %31 : vector<2x64xf32>
    %33 = math.exp %32 : vector<2x64xf32>
    %cst_23 = arith.constant 1.000000e+00 : f32
    %34 = vector.broadcast %cst_23 : f32 to vector<2x64xf32>
    %35 = arith.addf %34, %33 : vector<2x64xf32>
    %36 = arith.divf %34, %35 : vector<2x64xf32>
    %37 = vector.extract_strided_slice %17 {offsets = [0, 128], sizes = [2, 64], strides = [1, 1]} : vector<2x192xf32> to vector<2x64xf32>
    %38 = vector.extract_strided_slice %20 {offsets = [0, 128], sizes = [2, 64], strides = [1, 1]} : vector<2x192xf32> to vector<2x64xf32>
    %39 = arith.mulf %28, %38 : vector<2x64xf32>
    %40 = arith.addf %37, %39 : vector<2x64xf32>
    %41 = math.tanh %40 : vector<2x64xf32>
    %cst_24 = arith.constant 1.000000e+00 : f32
    %42 = vector.broadcast %cst_24 : f32 to vector<2x64xf32>
    %43 = arith.subf %42, %36 : vector<2x64xf32>
    %44 = arith.mulf %43, %41 : vector<2x64xf32>
    %45 = arith.mulf %36, %15 : vector<2x64xf32>
    %46 = arith.addf %44, %45 : vector<2x64xf32>
    %47 = vector.extract_strided_slice %12 {offsets = [1, 0, 0], sizes = [1, 2, 192], strides = [1, 1, 1]} : vector<8x2x192xf32> to vector<1x2x192xf32>
    %48 = vector.shape_cast %47 : vector<1x2x192xf32> to vector<2x192xf32>
    %cst_25 = arith.constant dense<0.000000e+00> : vector<2x192xf32>
    %49 = tpu.matmul %46, %13, %cst_25 {dimension_numbers = #tpu.dot_dimension_numbers<[1], [0], [0], [1], [0, 0, 1, 1], [], []>} : vector<2x64xf32>, vector<64x192xf32>, vector<2x192xf32> -> vector<2x192xf32>
    %50 = vector.broadcast %14 : vector<1x192xf32> to vector<2x192xf32>
    %51 = arith.addf %49, %50 : vector<2x192xf32>
    %52 = vector.extract_strided_slice %48 {offsets = [0, 0], sizes = [2, 64], strides = [1, 1]} : vector<2x192xf32> to vector<2x64xf32>
    %53 = vector.extract_strided_slice %51 {offsets = [0, 0], sizes = [2, 64], strides = [1, 1]} : vector<2x192xf32> to vector<2x64xf32>
    %54 = arith.addf %52, %53 : vector<2x64xf32>
    %55 = arith.negf %54 : vector<2x64xf32>
    %56 = math.exp %55 : vector<2x64xf32>
    %cst_26 = arith.constant 1.000000e+00 : f32
    %57 = vector.broadcast %cst_26 : f32 to vector<2x64xf32>
    %58 = arith.addf %57, %56 : vector<2x64xf32>
    %59 = arith.divf %57, %58 : vector<2x64xf32>
    %60 = vector.extract_strided_slice %48 {offsets = [0, 64], sizes = [2, 64], strides = [1, 1]} : vector<2x192xf32> to vector<2x64xf32>
    %61 = vector.extract_strided_slice %51 {offsets = [0, 64], sizes = [2, 64], strides = [1, 1]} : vector<2x192xf32> to vector<2x64xf32>
    %62 = arith.addf %60, %61 : vector<2x64xf32>
    %63 = arith.negf %62 : vector<2x64xf32>
    %64 = math.exp %63 : vector<2x64xf32>
    %cst_27 = arith.constant 1.000000e+00 : f32
    %65 = vector.broadcast %cst_27 : f32 to vector<2x64xf32>
    %66 = arith.addf %65, %64 : vector<2x64xf32>
    %67 = arith.divf %65, %66 : vector<2x64xf32>
    %68 = vector.extract_strided_slice %48 {offsets = [0, 128], sizes = [2, 64], strides = [1, 1]} : vector<2x192xf32> to vector<2x64xf32>
    %69 = vector.extract_strided_slice %51 {offsets = [0, 128], sizes = [2, 64], strides = [1, 1]} : vector<2x192xf32> to vector<2x64xf32>
    %70 = arith.mulf %59, %69 : vector<2x64xf32>
    %71 = arith.addf %68, %70 : vector<2x64xf32>
    %72 = math.tanh %71 : vector<2x64xf32>
    %cst_28 = arith.constant 1.000000e+00 : f32
    %73 = vector.broadcast %cst_28 : f32 to vector<2x64xf32>
    %74 = arith.subf %73, %67 : vector<2x64xf32>
    %75 = arith.mulf %74, %72 : vector<2x64xf32>
    %76 = arith.mulf %67, %46 : vector<2x64xf32>
    %77 = arith.addf %75, %76 : vector<2x64xf32>
    %78 = vector.extract_strided_slice %12 {offsets = [2, 0, 0], sizes = [1, 2, 192], strides = [1, 1, 1]} : vector<8x2x192xf32> to vector<1x2x192xf32>
    %79 = vector.shape_cast %78 : vector<1x2x192xf32> to vector<2x192xf32>
    %cst_29 = arith.constant dense<0.000000e+00> : vector<2x192xf32>
    %80 = tpu.matmul %77, %13, %cst_29 {dimension_numbers = #tpu.dot_dimension_numbers<[1], [0], [0], [1], [0, 0, 1, 1], [], []>} : vector<2x64xf32>, vector<64x192xf32>, vector<2x192xf32> -> vector<2x192xf32>
    %81 = vector.broadcast %14 : vector<1x192xf32> to vector<2x192xf32>
    %82 = arith.addf %80, %81 : vector<2x192xf32>
    %83 = vector.extract_strided_slice %79 {offsets = [0, 0], sizes = [2, 64], strides = [1, 1]} : vector<2x192xf32> to vector<2x64xf32>
    %84 = vector.extract_strided_slice %82 {offsets = [0, 0], sizes = [2, 64], strides = [1, 1]} : vector<2x192xf32> to vector<2x64xf32>
    %85 = arith.addf %83, %84 : vector<2x64xf32>
    %86 = arith.negf %85 : vector<2x64xf32>
    %87 = math.exp %86 : vector<2x64xf32>
    %cst_30 = arith.constant 1.000000e+00 : f32
    %88 = vector.broadcast %cst_30 : f32 to vector<2x64xf32>
    %89 = arith.addf %88, %87 : vector<2x64xf32>
    %90 = arith.divf %88, %89 : vector<2x64xf32>
    %91 = vector.extract_strided_slice %79 {offsets = [0, 64], sizes = [2, 64], strides = [1, 1]} : vector<2x192xf32> to vector<2x64xf32>
    %92 = vector.extract_strided_slice %82 {offsets = [0, 64], sizes = [2, 64], strides = [1, 1]} : vector<2x192xf32> to vector<2x64xf32>
    %93 = arith.addf %91, %92 : vector<2x64xf32>
    %94 = arith.negf %93 : vector<2x64xf32>
    %95 = math.exp %94 : vector<2x64xf32>
    %cst_31 = arith.constant 1.000000e+00 : f32
    %96 = vector.broadcast %cst_31 : f32 to vector<2x64xf32>
    %97 = arith.addf %96, %95 : vector<2x64xf32>
    %98 = arith.divf %96, %97 : vector<2x64xf32>
    %99 = vector.extract_strided_slice %79 {offsets = [0, 128], sizes = [2, 64], strides = [1, 1]} : vector<2x192xf32> to vector<2x64xf32>
    %100 = vector.extract_strided_slice %82 {offsets = [0, 128], sizes = [2, 64], strides = [1, 1]} : vector<2x192xf32> to vector<2x64xf32>
    %101 = arith.mulf %90, %100 : vector<2x64xf32>
    %102 = arith.addf %99, %101 : vector<2x64xf32>
    %103 = math.tanh %102 : vector<2x64xf32>
    %cst_32 = arith.constant 1.000000e+00 : f32
    %104 = vector.broadcast %cst_32 : f32 to vector<2x64xf32>
    %105 = arith.subf %104, %98 : vector<2x64xf32>
    %106 = arith.mulf %105, %103 : vector<2x64xf32>
    %107 = arith.mulf %98, %77 : vector<2x64xf32>
    %108 = arith.addf %106, %107 : vector<2x64xf32>
    %109 = vector.extract_strided_slice %12 {offsets = [3, 0, 0], sizes = [1, 2, 192], strides = [1, 1, 1]} : vector<8x2x192xf32> to vector<1x2x192xf32>
    %110 = vector.shape_cast %109 : vector<1x2x192xf32> to vector<2x192xf32>
    %cst_33 = arith.constant dense<0.000000e+00> : vector<2x192xf32>
    %111 = tpu.matmul %108, %13, %cst_33 {dimension_numbers = #tpu.dot_dimension_numbers<[1], [0], [0], [1], [0, 0, 1, 1], [], []>} : vector<2x64xf32>, vector<64x192xf32>, vector<2x192xf32> -> vector<2x192xf32>
    %112 = vector.broadcast %14 : vector<1x192xf32> to vector<2x192xf32>
    %113 = arith.addf %111, %112 : vector<2x192xf32>
    %114 = vector.extract_strided_slice %110 {offsets = [0, 0], sizes = [2, 64], strides = [1, 1]} : vector<2x192xf32> to vector<2x64xf32>
    %115 = vector.extract_strided_slice %113 {offsets = [0, 0], sizes = [2, 64], strides = [1, 1]} : vector<2x192xf32> to vector<2x64xf32>
    %116 = arith.addf %114, %115 : vector<2x64xf32>
    %117 = arith.negf %116 : vector<2x64xf32>
    %118 = math.exp %117 : vector<2x64xf32>
    %cst_34 = arith.constant 1.000000e+00 : f32
    %119 = vector.broadcast %cst_34 : f32 to vector<2x64xf32>
    %120 = arith.addf %119, %118 : vector<2x64xf32>
    %121 = arith.divf %119, %120 : vector<2x64xf32>
    %122 = vector.extract_strided_slice %110 {offsets = [0, 64], sizes = [2, 64], strides = [1, 1]} : vector<2x192xf32> to vector<2x64xf32>
    %123 = vector.extract_strided_slice %113 {offsets = [0, 64], sizes = [2, 64], strides = [1, 1]} : vector<2x192xf32> to vector<2x64xf32>
    %124 = arith.addf %122, %123 : vector<2x64xf32>
    %125 = arith.negf %124 : vector<2x64xf32>
    %126 = math.exp %125 : vector<2x64xf32>
    %cst_35 = arith.constant 1.000000e+00 : f32
    %127 = vector.broadcast %cst_35 : f32 to vector<2x64xf32>
    %128 = arith.addf %127, %126 : vector<2x64xf32>
    %129 = arith.divf %127, %128 : vector<2x64xf32>
    %130 = vector.extract_strided_slice %110 {offsets = [0, 128], sizes = [2, 64], strides = [1, 1]} : vector<2x192xf32> to vector<2x64xf32>
    %131 = vector.extract_strided_slice %113 {offsets = [0, 128], sizes = [2, 64], strides = [1, 1]} : vector<2x192xf32> to vector<2x64xf32>
    %132 = arith.mulf %121, %131 : vector<2x64xf32>
    %133 = arith.addf %130, %132 : vector<2x64xf32>
    %134 = math.tanh %133 : vector<2x64xf32>
    %cst_36 = arith.constant 1.000000e+00 : f32
    %135 = vector.broadcast %cst_36 : f32 to vector<2x64xf32>
    %136 = arith.subf %135, %129 : vector<2x64xf32>
    %137 = arith.mulf %136, %134 : vector<2x64xf32>
    %138 = arith.mulf %129, %108 : vector<2x64xf32>
    %139 = arith.addf %137, %138 : vector<2x64xf32>
    %140 = vector.extract_strided_slice %12 {offsets = [4, 0, 0], sizes = [1, 2, 192], strides = [1, 1, 1]} : vector<8x2x192xf32> to vector<1x2x192xf32>
    %141 = vector.shape_cast %140 : vector<1x2x192xf32> to vector<2x192xf32>
    %cst_37 = arith.constant dense<0.000000e+00> : vector<2x192xf32>
    %142 = tpu.matmul %139, %13, %cst_37 {dimension_numbers = #tpu.dot_dimension_numbers<[1], [0], [0], [1], [0, 0, 1, 1], [], []>} : vector<2x64xf32>, vector<64x192xf32>, vector<2x192xf32> -> vector<2x192xf32>
    %143 = vector.broadcast %14 : vector<1x192xf32> to vector<2x192xf32>
    %144 = arith.addf %142, %143 : vector<2x192xf32>
    %145 = vector.extract_strided_slice %141 {offsets = [0, 0], sizes = [2, 64], strides = [1, 1]} : vector<2x192xf32> to vector<2x64xf32>
    %146 = vector.extract_strided_slice %144 {offsets = [0, 0], sizes = [2, 64], strides = [1, 1]} : vector<2x192xf32> to vector<2x64xf32>
    %147 = arith.addf %145, %146 : vector<2x64xf32>
    %148 = arith.negf %147 : vector<2x64xf32>
    %149 = math.exp %148 : vector<2x64xf32>
    %cst_38 = arith.constant 1.000000e+00 : f32
    %150 = vector.broadcast %cst_38 : f32 to vector<2x64xf32>
    %151 = arith.addf %150, %149 : vector<2x64xf32>
    %152 = arith.divf %150, %151 : vector<2x64xf32>
    %153 = vector.extract_strided_slice %141 {offsets = [0, 64], sizes = [2, 64], strides = [1, 1]} : vector<2x192xf32> to vector<2x64xf32>
    %154 = vector.extract_strided_slice %144 {offsets = [0, 64], sizes = [2, 64], strides = [1, 1]} : vector<2x192xf32> to vector<2x64xf32>
    %155 = arith.addf %153, %154 : vector<2x64xf32>
    %156 = arith.negf %155 : vector<2x64xf32>
    %157 = math.exp %156 : vector<2x64xf32>
    %cst_39 = arith.constant 1.000000e+00 : f32
    %158 = vector.broadcast %cst_39 : f32 to vector<2x64xf32>
    %159 = arith.addf %158, %157 : vector<2x64xf32>
    %160 = arith.divf %158, %159 : vector<2x64xf32>
    %161 = vector.extract_strided_slice %141 {offsets = [0, 128], sizes = [2, 64], strides = [1, 1]} : vector<2x192xf32> to vector<2x64xf32>
    %162 = vector.extract_strided_slice %144 {offsets = [0, 128], sizes = [2, 64], strides = [1, 1]} : vector<2x192xf32> to vector<2x64xf32>
    %163 = arith.mulf %152, %162 : vector<2x64xf32>
    %164 = arith.addf %161, %163 : vector<2x64xf32>
    %165 = math.tanh %164 : vector<2x64xf32>
    %cst_40 = arith.constant 1.000000e+00 : f32
    %166 = vector.broadcast %cst_40 : f32 to vector<2x64xf32>
    %167 = arith.subf %166, %160 : vector<2x64xf32>
    %168 = arith.mulf %167, %165 : vector<2x64xf32>
    %169 = arith.mulf %160, %139 : vector<2x64xf32>
    %170 = arith.addf %168, %169 : vector<2x64xf32>
    %171 = vector.extract_strided_slice %12 {offsets = [5, 0, 0], sizes = [1, 2, 192], strides = [1, 1, 1]} : vector<8x2x192xf32> to vector<1x2x192xf32>
    %172 = vector.shape_cast %171 : vector<1x2x192xf32> to vector<2x192xf32>
    %cst_41 = arith.constant dense<0.000000e+00> : vector<2x192xf32>
    %173 = tpu.matmul %170, %13, %cst_41 {dimension_numbers = #tpu.dot_dimension_numbers<[1], [0], [0], [1], [0, 0, 1, 1], [], []>} : vector<2x64xf32>, vector<64x192xf32>, vector<2x192xf32> -> vector<2x192xf32>
    %174 = vector.broadcast %14 : vector<1x192xf32> to vector<2x192xf32>
    %175 = arith.addf %173, %174 : vector<2x192xf32>
    %176 = vector.extract_strided_slice %172 {offsets = [0, 0], sizes = [2, 64], strides = [1, 1]} : vector<2x192xf32> to vector<2x64xf32>
    %177 = vector.extract_strided_slice %175 {offsets = [0, 0], sizes = [2, 64], strides = [1, 1]} : vector<2x192xf32> to vector<2x64xf32>
    %178 = arith.addf %176, %177 : vector<2x64xf32>
    %179 = arith.negf %178 : vector<2x64xf32>
    %180 = math.exp %179 : vector<2x64xf32>
    %cst_42 = arith.constant 1.000000e+00 : f32
    %181 = vector.broadcast %cst_42 : f32 to vector<2x64xf32>
    %182 = arith.addf %181, %180 : vector<2x64xf32>
    %183 = arith.divf %181, %182 : vector<2x64xf32>
    %184 = vector.extract_strided_slice %172 {offsets = [0, 64], sizes = [2, 64], strides = [1, 1]} : vector<2x192xf32> to vector<2x64xf32>
    %185 = vector.extract_strided_slice %175 {offsets = [0, 64], sizes = [2, 64], strides = [1, 1]} : vector<2x192xf32> to vector<2x64xf32>
    %186 = arith.addf %184, %185 : vector<2x64xf32>
    %187 = arith.negf %186 : vector<2x64xf32>
    %188 = math.exp %187 : vector<2x64xf32>
    %cst_43 = arith.constant 1.000000e+00 : f32
    %189 = vector.broadcast %cst_43 : f32 to vector<2x64xf32>
    %190 = arith.addf %189, %188 : vector<2x64xf32>
    %191 = arith.divf %189, %190 : vector<2x64xf32>
    %192 = vector.extract_strided_slice %172 {offsets = [0, 128], sizes = [2, 64], strides = [1, 1]} : vector<2x192xf32> to vector<2x64xf32>
    %193 = vector.extract_strided_slice %175 {offsets = [0, 128], sizes = [2, 64], strides = [1, 1]} : vector<2x192xf32> to vector<2x64xf32>
    %194 = arith.mulf %183, %193 : vector<2x64xf32>
    %195 = arith.addf %192, %194 : vector<2x64xf32>
    %196 = math.tanh %195 : vector<2x64xf32>
    %cst_44 = arith.constant 1.000000e+00 : f32
    %197 = vector.broadcast %cst_44 : f32 to vector<2x64xf32>
    %198 = arith.subf %197, %191 : vector<2x64xf32>
    %199 = arith.mulf %198, %196 : vector<2x64xf32>
    %200 = arith.mulf %191, %170 : vector<2x64xf32>
    %201 = arith.addf %199, %200 : vector<2x64xf32>
    %202 = vector.extract_strided_slice %12 {offsets = [6, 0, 0], sizes = [1, 2, 192], strides = [1, 1, 1]} : vector<8x2x192xf32> to vector<1x2x192xf32>
    %203 = vector.shape_cast %202 : vector<1x2x192xf32> to vector<2x192xf32>
    %cst_45 = arith.constant dense<0.000000e+00> : vector<2x192xf32>
    %204 = tpu.matmul %201, %13, %cst_45 {dimension_numbers = #tpu.dot_dimension_numbers<[1], [0], [0], [1], [0, 0, 1, 1], [], []>} : vector<2x64xf32>, vector<64x192xf32>, vector<2x192xf32> -> vector<2x192xf32>
    %205 = vector.broadcast %14 : vector<1x192xf32> to vector<2x192xf32>
    %206 = arith.addf %204, %205 : vector<2x192xf32>
    %207 = vector.extract_strided_slice %203 {offsets = [0, 0], sizes = [2, 64], strides = [1, 1]} : vector<2x192xf32> to vector<2x64xf32>
    %208 = vector.extract_strided_slice %206 {offsets = [0, 0], sizes = [2, 64], strides = [1, 1]} : vector<2x192xf32> to vector<2x64xf32>
    %209 = arith.addf %207, %208 : vector<2x64xf32>
    %210 = arith.negf %209 : vector<2x64xf32>
    %211 = math.exp %210 : vector<2x64xf32>
    %cst_46 = arith.constant 1.000000e+00 : f32
    %212 = vector.broadcast %cst_46 : f32 to vector<2x64xf32>
    %213 = arith.addf %212, %211 : vector<2x64xf32>
    %214 = arith.divf %212, %213 : vector<2x64xf32>
    %215 = vector.extract_strided_slice %203 {offsets = [0, 64], sizes = [2, 64], strides = [1, 1]} : vector<2x192xf32> to vector<2x64xf32>
    %216 = vector.extract_strided_slice %206 {offsets = [0, 64], sizes = [2, 64], strides = [1, 1]} : vector<2x192xf32> to vector<2x64xf32>
    %217 = arith.addf %215, %216 : vector<2x64xf32>
    %218 = arith.negf %217 : vector<2x64xf32>
    %219 = math.exp %218 : vector<2x64xf32>
    %cst_47 = arith.constant 1.000000e+00 : f32
    %220 = vector.broadcast %cst_47 : f32 to vector<2x64xf32>
    %221 = arith.addf %220, %219 : vector<2x64xf32>
    %222 = arith.divf %220, %221 : vector<2x64xf32>
    %223 = vector.extract_strided_slice %203 {offsets = [0, 128], sizes = [2, 64], strides = [1, 1]} : vector<2x192xf32> to vector<2x64xf32>
    %224 = vector.extract_strided_slice %206 {offsets = [0, 128], sizes = [2, 64], strides = [1, 1]} : vector<2x192xf32> to vector<2x64xf32>
    %225 = arith.mulf %214, %224 : vector<2x64xf32>
    %226 = arith.addf %223, %225 : vector<2x64xf32>
    %227 = math.tanh %226 : vector<2x64xf32>
    %cst_48 = arith.constant 1.000000e+00 : f32
    %228 = vector.broadcast %cst_48 : f32 to vector<2x64xf32>
    %229 = arith.subf %228, %222 : vector<2x64xf32>
    %230 = arith.mulf %229, %227 : vector<2x64xf32>
    %231 = arith.mulf %222, %201 : vector<2x64xf32>
    %232 = arith.addf %230, %231 : vector<2x64xf32>
    %233 = vector.extract_strided_slice %12 {offsets = [7, 0, 0], sizes = [1, 2, 192], strides = [1, 1, 1]} : vector<8x2x192xf32> to vector<1x2x192xf32>
    %234 = vector.shape_cast %233 : vector<1x2x192xf32> to vector<2x192xf32>
    %cst_49 = arith.constant dense<0.000000e+00> : vector<2x192xf32>
    %235 = tpu.matmul %232, %13, %cst_49 {dimension_numbers = #tpu.dot_dimension_numbers<[1], [0], [0], [1], [0, 0, 1, 1], [], []>} : vector<2x64xf32>, vector<64x192xf32>, vector<2x192xf32> -> vector<2x192xf32>
    %236 = vector.broadcast %14 : vector<1x192xf32> to vector<2x192xf32>
    %237 = arith.addf %235, %236 : vector<2x192xf32>
    %238 = vector.extract_strided_slice %234 {offsets = [0, 0], sizes = [2, 64], strides = [1, 1]} : vector<2x192xf32> to vector<2x64xf32>
    %239 = vector.extract_strided_slice %237 {offsets = [0, 0], sizes = [2, 64], strides = [1, 1]} : vector<2x192xf32> to vector<2x64xf32>
    %240 = arith.addf %238, %239 : vector<2x64xf32>
    %241 = arith.negf %240 : vector<2x64xf32>
    %242 = math.exp %241 : vector<2x64xf32>
    %cst_50 = arith.constant 1.000000e+00 : f32
    %243 = vector.broadcast %cst_50 : f32 to vector<2x64xf32>
    %244 = arith.addf %243, %242 : vector<2x64xf32>
    %245 = arith.divf %243, %244 : vector<2x64xf32>
    %246 = vector.extract_strided_slice %234 {offsets = [0, 64], sizes = [2, 64], strides = [1, 1]} : vector<2x192xf32> to vector<2x64xf32>
    %247 = vector.extract_strided_slice %237 {offsets = [0, 64], sizes = [2, 64], strides = [1, 1]} : vector<2x192xf32> to vector<2x64xf32>
    %248 = arith.addf %246, %247 : vector<2x64xf32>
    %249 = arith.negf %248 : vector<2x64xf32>
    %250 = math.exp %249 : vector<2x64xf32>
    %cst_51 = arith.constant 1.000000e+00 : f32
    %251 = vector.broadcast %cst_51 : f32 to vector<2x64xf32>
    %252 = arith.addf %251, %250 : vector<2x64xf32>
    %253 = arith.divf %251, %252 : vector<2x64xf32>
    %254 = vector.extract_strided_slice %234 {offsets = [0, 128], sizes = [2, 64], strides = [1, 1]} : vector<2x192xf32> to vector<2x64xf32>
    %255 = vector.extract_strided_slice %237 {offsets = [0, 128], sizes = [2, 64], strides = [1, 1]} : vector<2x192xf32> to vector<2x64xf32>
    %256 = arith.mulf %245, %255 : vector<2x64xf32>
    %257 = arith.addf %254, %256 : vector<2x64xf32>
    %258 = math.tanh %257 : vector<2x64xf32>
    %cst_52 = arith.constant 1.000000e+00 : f32
    %259 = vector.broadcast %cst_52 : f32 to vector<2x64xf32>
    %260 = arith.subf %259, %253 : vector<2x64xf32>
    %261 = arith.mulf %260, %258 : vector<2x64xf32>
    %262 = arith.mulf %253, %232 : vector<2x64xf32>
    %263 = arith.addf %261, %262 : vector<2x64xf32>
    %264 = vector.shape_cast %46 : vector<2x64xf32> to vector<1x2x64xf32>
    %265 = vector.shape_cast %77 : vector<2x64xf32> to vector<1x2x64xf32>
    %266 = vector.shape_cast %108 : vector<2x64xf32> to vector<1x2x64xf32>
    %267 = vector.shape_cast %139 : vector<2x64xf32> to vector<1x2x64xf32>
    %268 = vector.shape_cast %170 : vector<2x64xf32> to vector<1x2x64xf32>
    %269 = vector.shape_cast %201 : vector<2x64xf32> to vector<1x2x64xf32>
    %270 = vector.shape_cast %232 : vector<2x64xf32> to vector<1x2x64xf32>
    %271 = vector.shape_cast %263 : vector<2x64xf32> to vector<1x2x64xf32>
    %272 = tpu.concatenate %264, %265, %266, %267, %268, %269, %270, %271 in 0 : vector<1x2x64xf32>, vector<1x2x64xf32>, vector<1x2x64xf32>, vector<1x2x64xf32>, vector<1x2x64xf32>, vector<1x2x64xf32>, vector<1x2x64xf32>, vector<1x2x64xf32> -> vector<8x2x64xf32>
    %273 = vector.broadcast %1 : vector<8x2x1xf32> to vector<8x2x64xf32>
    %274 = arith.mulf %272, %273 : vector<8x2x64xf32>
    %275 = vector.extract_strided_slice %274 {offsets = [0, 0, 0], sizes = [8, 2, 32], strides = [1, 1, 1]} : vector<8x2x64xf32> to vector<8x2x32xf32>
    %276 = vector.extract_strided_slice %274 {offsets = [0, 0, 32], sizes = [8, 2, 32], strides = [1, 1, 1]} : vector<8x2x64xf32> to vector<8x2x32xf32>
    %c0_53 = arith.constant 0 : index
    %c0_54 = arith.constant 0 : index
    %277 = vector.load %arg9[%c0_53, %c0_54] : memref<1x32xf32, #tpu.memory_space<vmem>>, vector<1x32xf32>
    %278 = vector.shape_cast %277 : vector<1x32xf32> to vector<1x1x32xf32>
    %279 = vector.broadcast %278 : vector<1x1x32xf32> to vector<8x2x32xf32>
    %280 = arith.mulf %275, %279 : vector<8x2x32xf32>
    %cst_55 = arith.constant dense<0.000000e+00> : vector<8x2xf32>
    %281 = vector.multi_reduction <add>, %280, %cst_55 [2] : vector<8x2x32xf32> to vector<8x2xf32>
    %282 = vector.shape_cast %281 : vector<8x2xf32> to vector<8x2x1xf32>
    %c0_56 = arith.constant 0 : index
    %c0_57 = arith.constant 0 : index
    %283 = vector.load %arg10[%c0_56, %c0_57] : memref<1x1xf32, #tpu.memory_space<vmem>>, vector<1x1xf32>
    %284 = vector.shape_cast %283 : vector<1x1xf32> to vector<1x1x1xf32>
    %285 = vector.broadcast %284 : vector<1x1x1xf32> to vector<8x2x1xf32>
    %286 = arith.addf %282, %285 : vector<8x2x1xf32>
    %287 = arith.addf %286, %2 : vector<8x2x1xf32>
    %288 = vector.shape_cast %276 : vector<8x2x32xf32> to vector<16x32xf32>
    %c0_58 = arith.constant 0 : index
    %c0_59 = arith.constant 0 : index
    %289 = vector.load %arg11[%c0_58, %c0_59] : memref<32x32xf32, #tpu.memory_space<vmem>>, vector<32x32xf32>
    %cst_60 = arith.constant dense<0.000000e+00> : vector<16x32xf32>
    %290 = tpu.matmul %288, %289, %cst_60 {dimension_numbers = #tpu.dot_dimension_numbers<[1], [0], [0], [1], [0, 0, 1, 1], [], []>} : vector<16x32xf32>, vector<32x32xf32>, vector<16x32xf32> -> vector<16x32xf32>
    %c0_61 = arith.constant 0 : index
    %c0_62 = arith.constant 0 : index
    %291 = vector.load %arg12[%c0_61, %c0_62] : memref<1x32xf32, #tpu.memory_space<vmem>>, vector<1x32xf32>
    %292 = vector.broadcast %291 : vector<1x32xf32> to vector<16x32xf32>
    %293 = arith.addf %290, %292 : vector<16x32xf32>
    %294 = math.tanh %293 : vector<16x32xf32>
    %295 = vector.shape_cast %294 : vector<16x32xf32> to vector<8x2x32xf32>
    %296 = arith.mulf %295, %6 : vector<8x2x32xf32>
    %297 = vector.broadcast %1 : vector<8x2x1xf32> to vector<8x2x32xf32>
    %298 = arith.mulf %296, %297 : vector<8x2x32xf32>
    %cst_63 = arith.constant -1.000000e+30 : f32
    %299 = vector.broadcast %cst_63 : f32 to vector<2x1xf32>
    %cst_64 = arith.constant 0.000000e+00 : f32
    %300 = vector.broadcast %cst_64 : f32 to vector<2x1xf32>
    %cst_65 = arith.constant 0.000000e+00 : f32
    %301 = vector.broadcast %cst_65 : f32 to vector<2x32xf32>
    %302 = vector.extract_strided_slice %287 {offsets = [0, 0, 0], sizes = [1, 2, 1], strides = [1, 1, 1]} : vector<8x2x1xf32> to vector<1x2x1xf32>
    %303 = vector.shape_cast %302 : vector<1x2x1xf32> to vector<2x1xf32>
    %304 = arith.maximumf %299, %303 : vector<2x1xf32>
    %305 = arith.subf %299, %304 : vector<2x1xf32>
    %306 = math.exp %305 : vector<2x1xf32>
    %307 = arith.subf %303, %304 : vector<2x1xf32>
    %308 = math.exp %307 : vector<2x1xf32>
    %309 = arith.mulf %300, %306 : vector<2x1xf32>
    %310 = arith.addf %309, %308 : vector<2x1xf32>
    %311 = vector.broadcast %306 : vector<2x1xf32> to vector<2x32xf32>
    %312 = arith.mulf %301, %311 : vector<2x32xf32>
    %313 = vector.extract_strided_slice %298 {offsets = [0, 0, 0], sizes = [1, 2, 32], strides = [1, 1, 1]} : vector<8x2x32xf32> to vector<1x2x32xf32>
    %314 = vector.shape_cast %313 : vector<1x2x32xf32> to vector<2x32xf32>
    %315 = vector.broadcast %308 : vector<2x1xf32> to vector<2x32xf32>
    %316 = arith.mulf %315, %314 : vector<2x32xf32>
    %317 = arith.addf %312, %316 : vector<2x32xf32>
    %318 = vector.broadcast %310 : vector<2x1xf32> to vector<2x32xf32>
    %319 = arith.divf %317, %318 : vector<2x32xf32>
    %320 = vector.extract_strided_slice %287 {offsets = [1, 0, 0], sizes = [1, 2, 1], strides = [1, 1, 1]} : vector<8x2x1xf32> to vector<1x2x1xf32>
    %321 = vector.shape_cast %320 : vector<1x2x1xf32> to vector<2x1xf32>
    %322 = arith.maximumf %304, %321 : vector<2x1xf32>
    %323 = arith.subf %304, %322 : vector<2x1xf32>
    %324 = math.exp %323 : vector<2x1xf32>
    %325 = arith.subf %321, %322 : vector<2x1xf32>
    %326 = math.exp %325 : vector<2x1xf32>
    %327 = arith.mulf %310, %324 : vector<2x1xf32>
    %328 = arith.addf %327, %326 : vector<2x1xf32>
    %329 = vector.broadcast %324 : vector<2x1xf32> to vector<2x32xf32>
    %330 = arith.mulf %317, %329 : vector<2x32xf32>
    %331 = vector.extract_strided_slice %298 {offsets = [1, 0, 0], sizes = [1, 2, 32], strides = [1, 1, 1]} : vector<8x2x32xf32> to vector<1x2x32xf32>
    %332 = vector.shape_cast %331 : vector<1x2x32xf32> to vector<2x32xf32>
    %333 = vector.broadcast %326 : vector<2x1xf32> to vector<2x32xf32>
    %334 = arith.mulf %333, %332 : vector<2x32xf32>
    %335 = arith.addf %330, %334 : vector<2x32xf32>
    %336 = vector.broadcast %328 : vector<2x1xf32> to vector<2x32xf32>
    %337 = arith.divf %335, %336 : vector<2x32xf32>
    %338 = vector.extract_strided_slice %287 {offsets = [2, 0, 0], sizes = [1, 2, 1], strides = [1, 1, 1]} : vector<8x2x1xf32> to vector<1x2x1xf32>
    %339 = vector.shape_cast %338 : vector<1x2x1xf32> to vector<2x1xf32>
    %340 = arith.maximumf %322, %339 : vector<2x1xf32>
    %341 = arith.subf %322, %340 : vector<2x1xf32>
    %342 = math.exp %341 : vector<2x1xf32>
    %343 = arith.subf %339, %340 : vector<2x1xf32>
    %344 = math.exp %343 : vector<2x1xf32>
    %345 = arith.mulf %328, %342 : vector<2x1xf32>
    %346 = arith.addf %345, %344 : vector<2x1xf32>
    %347 = vector.broadcast %342 : vector<2x1xf32> to vector<2x32xf32>
    %348 = arith.mulf %335, %347 : vector<2x32xf32>
    %349 = vector.extract_strided_slice %298 {offsets = [2, 0, 0], sizes = [1, 2, 32], strides = [1, 1, 1]} : vector<8x2x32xf32> to vector<1x2x32xf32>
    %350 = vector.shape_cast %349 : vector<1x2x32xf32> to vector<2x32xf32>
    %351 = vector.broadcast %344 : vector<2x1xf32> to vector<2x32xf32>
    %352 = arith.mulf %351, %350 : vector<2x32xf32>
    %353 = arith.addf %348, %352 : vector<2x32xf32>
    %354 = vector.broadcast %346 : vector<2x1xf32> to vector<2x32xf32>
    %355 = arith.divf %353, %354 : vector<2x32xf32>
    %356 = vector.extract_strided_slice %287 {offsets = [3, 0, 0], sizes = [1, 2, 1], strides = [1, 1, 1]} : vector<8x2x1xf32> to vector<1x2x1xf32>
    %357 = vector.shape_cast %356 : vector<1x2x1xf32> to vector<2x1xf32>
    %358 = arith.maximumf %340, %357 : vector<2x1xf32>
    %359 = arith.subf %340, %358 : vector<2x1xf32>
    %360 = math.exp %359 : vector<2x1xf32>
    %361 = arith.subf %357, %358 : vector<2x1xf32>
    %362 = math.exp %361 : vector<2x1xf32>
    %363 = arith.mulf %346, %360 : vector<2x1xf32>
    %364 = arith.addf %363, %362 : vector<2x1xf32>
    %365 = vector.broadcast %360 : vector<2x1xf32> to vector<2x32xf32>
    %366 = arith.mulf %353, %365 : vector<2x32xf32>
    %367 = vector.extract_strided_slice %298 {offsets = [3, 0, 0], sizes = [1, 2, 32], strides = [1, 1, 1]} : vector<8x2x32xf32> to vector<1x2x32xf32>
    %368 = vector.shape_cast %367 : vector<1x2x32xf32> to vector<2x32xf32>
    %369 = vector.broadcast %362 : vector<2x1xf32> to vector<2x32xf32>
    %370 = arith.mulf %369, %368 : vector<2x32xf32>
    %371 = arith.addf %366, %370 : vector<2x32xf32>
    %372 = vector.broadcast %364 : vector<2x1xf32> to vector<2x32xf32>
    %373 = arith.divf %371, %372 : vector<2x32xf32>
    %374 = vector.extract_strided_slice %287 {offsets = [4, 0, 0], sizes = [1, 2, 1], strides = [1, 1, 1]} : vector<8x2x1xf32> to vector<1x2x1xf32>
    %375 = vector.shape_cast %374 : vector<1x2x1xf32> to vector<2x1xf32>
    %376 = arith.maximumf %358, %375 : vector<2x1xf32>
    %377 = arith.subf %358, %376 : vector<2x1xf32>
    %378 = math.exp %377 : vector<2x1xf32>
    %379 = arith.subf %375, %376 : vector<2x1xf32>
    %380 = math.exp %379 : vector<2x1xf32>
    %381 = arith.mulf %364, %378 : vector<2x1xf32>
    %382 = arith.addf %381, %380 : vector<2x1xf32>
    %383 = vector.broadcast %378 : vector<2x1xf32> to vector<2x32xf32>
    %384 = arith.mulf %371, %383 : vector<2x32xf32>
    %385 = vector.extract_strided_slice %298 {offsets = [4, 0, 0], sizes = [1, 2, 32], strides = [1, 1, 1]} : vector<8x2x32xf32> to vector<1x2x32xf32>
    %386 = vector.shape_cast %385 : vector<1x2x32xf32> to vector<2x32xf32>
    %387 = vector.broadcast %380 : vector<2x1xf32> to vector<2x32xf32>
    %388 = arith.mulf %387, %386 : vector<2x32xf32>
    %389 = arith.addf %384, %388 : vector<2x32xf32>
    %390 = vector.broadcast %382 : vector<2x1xf32> to vector<2x32xf32>
    %391 = arith.divf %389, %390 : vector<2x32xf32>
    %392 = vector.extract_strided_slice %287 {offsets = [5, 0, 0], sizes = [1, 2, 1], strides = [1, 1, 1]} : vector<8x2x1xf32> to vector<1x2x1xf32>
    %393 = vector.shape_cast %392 : vector<1x2x1xf32> to vector<2x1xf32>
    %394 = arith.maximumf %376, %393 : vector<2x1xf32>
    %395 = arith.subf %376, %394 : vector<2x1xf32>
    %396 = math.exp %395 : vector<2x1xf32>
    %397 = arith.subf %393, %394 : vector<2x1xf32>
    %398 = math.exp %397 : vector<2x1xf32>
    %399 = arith.mulf %382, %396 : vector<2x1xf32>
    %400 = arith.addf %399, %398 : vector<2x1xf32>
    %401 = vector.broadcast %396 : vector<2x1xf32> to vector<2x32xf32>
    %402 = arith.mulf %389, %401 : vector<2x32xf32>
    %403 = vector.extract_strided_slice %298 {offsets = [5, 0, 0], sizes = [1, 2, 32], strides = [1, 1, 1]} : vector<8x2x32xf32> to vector<1x2x32xf32>
    %404 = vector.shape_cast %403 : vector<1x2x32xf32> to vector<2x32xf32>
    %405 = vector.broadcast %398 : vector<2x1xf32> to vector<2x32xf32>
    %406 = arith.mulf %405, %404 : vector<2x32xf32>
    %407 = arith.addf %402, %406 : vector<2x32xf32>
    %408 = vector.broadcast %400 : vector<2x1xf32> to vector<2x32xf32>
    %409 = arith.divf %407, %408 : vector<2x32xf32>
    %410 = vector.extract_strided_slice %287 {offsets = [6, 0, 0], sizes = [1, 2, 1], strides = [1, 1, 1]} : vector<8x2x1xf32> to vector<1x2x1xf32>
    %411 = vector.shape_cast %410 : vector<1x2x1xf32> to vector<2x1xf32>
    %412 = arith.maximumf %394, %411 : vector<2x1xf32>
    %413 = arith.subf %394, %412 : vector<2x1xf32>
    %414 = math.exp %413 : vector<2x1xf32>
    %415 = arith.subf %411, %412 : vector<2x1xf32>
    %416 = math.exp %415 : vector<2x1xf32>
    %417 = arith.mulf %400, %414 : vector<2x1xf32>
    %418 = arith.addf %417, %416 : vector<2x1xf32>
    %419 = vector.broadcast %414 : vector<2x1xf32> to vector<2x32xf32>
    %420 = arith.mulf %407, %419 : vector<2x32xf32>
    %421 = vector.extract_strided_slice %298 {offsets = [6, 0, 0], sizes = [1, 2, 32], strides = [1, 1, 1]} : vector<8x2x32xf32> to vector<1x2x32xf32>
    %422 = vector.shape_cast %421 : vector<1x2x32xf32> to vector<2x32xf32>
    %423 = vector.broadcast %416 : vector<2x1xf32> to vector<2x32xf32>
    %424 = arith.mulf %423, %422 : vector<2x32xf32>
    %425 = arith.addf %420, %424 : vector<2x32xf32>
    %426 = vector.broadcast %418 : vector<2x1xf32> to vector<2x32xf32>
    %427 = arith.divf %425, %426 : vector<2x32xf32>
    %428 = vector.extract_strided_slice %287 {offsets = [7, 0, 0], sizes = [1, 2, 1], strides = [1, 1, 1]} : vector<8x2x1xf32> to vector<1x2x1xf32>
    %429 = vector.shape_cast %428 : vector<1x2x1xf32> to vector<2x1xf32>
    %430 = arith.maximumf %412, %429 : vector<2x1xf32>
    %431 = arith.subf %412, %430 : vector<2x1xf32>
    %432 = math.exp %431 : vector<2x1xf32>
    %433 = arith.subf %429, %430 : vector<2x1xf32>
    %434 = math.exp %433 : vector<2x1xf32>
    %435 = arith.mulf %418, %432 : vector<2x1xf32>
    %436 = arith.addf %435, %434 : vector<2x1xf32>
    %437 = vector.broadcast %432 : vector<2x1xf32> to vector<2x32xf32>
    %438 = arith.mulf %425, %437 : vector<2x32xf32>
    %439 = vector.extract_strided_slice %298 {offsets = [7, 0, 0], sizes = [1, 2, 32], strides = [1, 1, 1]} : vector<8x2x32xf32> to vector<1x2x32xf32>
    %440 = vector.shape_cast %439 : vector<1x2x32xf32> to vector<2x32xf32>
    %441 = vector.broadcast %434 : vector<2x1xf32> to vector<2x32xf32>
    %442 = arith.mulf %441, %440 : vector<2x32xf32>
    %443 = arith.addf %438, %442 : vector<2x32xf32>
    %444 = vector.broadcast %436 : vector<2x1xf32> to vector<2x32xf32>
    %445 = arith.divf %443, %444 : vector<2x32xf32>
    %446 = vector.shape_cast %319 : vector<2x32xf32> to vector<1x2x32xf32>
    %447 = vector.shape_cast %337 : vector<2x32xf32> to vector<1x2x32xf32>
    %448 = vector.shape_cast %355 : vector<2x32xf32> to vector<1x2x32xf32>
    %449 = vector.shape_cast %373 : vector<2x32xf32> to vector<1x2x32xf32>
    %450 = vector.shape_cast %391 : vector<2x32xf32> to vector<1x2x32xf32>
    %451 = vector.shape_cast %409 : vector<2x32xf32> to vector<1x2x32xf32>
    %452 = vector.shape_cast %427 : vector<2x32xf32> to vector<1x2x32xf32>
    %453 = vector.shape_cast %445 : vector<2x32xf32> to vector<1x2x32xf32>
    %454 = tpu.concatenate %446, %447, %448, %449, %450, %451, %452, %453 in 0 : vector<1x2x32xf32>, vector<1x2x32xf32>, vector<1x2x32xf32>, vector<1x2x32xf32>, vector<1x2x32xf32>, vector<1x2x32xf32>, vector<1x2x32xf32>, vector<1x2x32xf32> -> vector<8x2x32xf32>
    %455 = vector.shape_cast %454 : vector<8x2x32xf32> to vector<16x32xf32>
    %456 = vector.broadcast %3 : vector<16x1xf32> to vector<16x32xf32>
    %457 = arith.mulf %455, %456 : vector<16x32xf32>
    %c0_66 = arith.constant 0 : index
    %c0_67 = arith.constant 0 : index
    %458 = vector.load %arg13[%c0_66, %c0_67] : memref<32x128xf32, #tpu.memory_space<vmem>>, vector<32x128xf32>
    %cst_68 = arith.constant dense<0.000000e+00> : vector<16x128xf32>
    %459 = tpu.matmul %457, %458, %cst_68 {dimension_numbers = #tpu.dot_dimension_numbers<[1], [0], [0], [1], [0, 0, 1, 1], [], []>} : vector<16x32xf32>, vector<32x128xf32>, vector<16x128xf32> -> vector<16x128xf32>
    %c0_69 = arith.constant 0 : index
    %c0_70 = arith.constant 0 : index
    %460 = vector.load %arg14[%c0_69, %c0_70] : memref<1x128xf32, #tpu.memory_space<vmem>>, vector<1x128xf32>
    %461 = vector.broadcast %460 : vector<1x128xf32> to vector<16x128xf32>
    %462 = arith.addf %459, %461 : vector<16x128xf32>
    %463 = arith.negf %462 : vector<16x128xf32>
    %464 = math.exp %463 : vector<16x128xf32>
    %cst_71 = arith.constant 1.000000e+00 : f32
    %465 = vector.broadcast %cst_71 : f32 to vector<16x128xf32>
    %466 = arith.addf %465, %464 : vector<16x128xf32>
    %467 = arith.divf %465, %466 : vector<16x128xf32>
    %c0_72 = arith.constant 0 : index
    %c0_73 = arith.constant 0 : index
    %468 = vector.load %arg15[%c0_72, %c0_73] : memref<16x128xf32, #tpu.memory_space<vmem>>, vector<16x128xf32>
    tpu.vector_store %arg15[%c0_72, %c0_73], %467 {strides = array<i32>} : memref<16x128xf32, #tpu.memory_space<vmem>>, vector<16x128xf32>,
    return
  }
}

</mosaic_0001>

<llo_original>
// kernel: tpu_custom_call.1
$region0: #{tpu_custom_call.1}
  #allocation0 [shape = 'u32[]', space=smem, size = 0x4, offset = 0x4, fixed_abs, tag = 'smem constant byte address 0x4 - core index']
  #allocation1 [shape = 'u32[144,128]{1,0:T(1,128)}', space=vmem, size = 0x12000, scoped, tag = 'internal scratch']
  #allocation2 [shape = 'f32[1,1]{1,0:T(1,128)S(1)}', space=vmem, size = 0x200, scoped, tag = 'scoped memory for tpu_custom_call.1']
  %s0 = inlined_call_operand.hbm [shape: f32[16,64], index: 0, kind: input, shape index: {}]
  %s1 = inlined_call_operand.vmem [shape: f32[8,2,1], index: 1, kind: input, shape index: {}]
  %s2 = inlined_call_operand.vmem [shape: f32[8,2,1], index: 2, kind: input, shape index: {}]
  %s3 = inlined_call_operand.vmem [shape: f32[16,1], index: 3, kind: input, shape index: {}]
  %s4 = inlined_call_operand.vmem [shape: f32[64,32], index: 4, kind: input, shape index: {}]
  %s5 = inlined_call_operand.hbm [shape: f32[32,192], index: 5, kind: input, shape index: {}]
  %s6 = inlined_call_operand.vmem [shape: f32[64,192], index: 6, kind: input, shape index: {}]
  %s7 = inlined_call_operand.vmem [shape: f32[1,192], index: 7, kind: input, shape index: {}]
  %s8 = inlined_call_operand.hbm [shape: f32[1,192], index: 8, kind: input, shape index: {}]
  %s9 = inlined_call_operand.hbm [shape: f32[1,32], index: 9, kind: input, shape index: {}]
  %s10 = inlined_call_operand.<no memory space> [shape: f32[1,1], index: 10, kind: input, shape index: {}]
  %s11 = inlined_call_operand.vmem [shape: f32[32,32], index: 11, kind: input, shape index: {}]
  %s12 = inlined_call_operand.hbm [shape: f32[1,32], index: 12, kind: input, shape index: {}]
  %s13 = inlined_call_operand.vmem [shape: f32[32,128], index: 13, kind: input, shape index: {}]
  %s14 = inlined_call_operand.vmem [shape: f32[1,128], index: 14, kind: input, shape index: {}]
  %s15 = inlined_call_operand.hbm [shape: f32[16,128], index: 15, kind: output, shape index: {}]
  %s16 = sld [smem:[#allocation0]]
  $region90: #{tpu_custom_call.1} parent=0
    _
  %s18 = ssub.s32 1, %s16
  %s19 = scalar_select 0, %s18, %s16
  %v20 = vstv %s10
  %21 = vst [vmem:[#allocation2] sm:$0x1] %v20
  $region1: #{tpu_custom_call.1} parent=0
    #allocation3 [shape = 'u8[8192]{0}', space=vmem, size = 0x2000, scoped, tag = 'input window, operand 0, single buffered']
    #allocation4 [shape = 's32[1]{0}', space=sflag, size = 0x4, scoped, tag = 'scoped memory for tpu_custom_call.1']
    #allocation5 [shape = 's32[1]{0}', space=sflag, size = 0x4, scoped, tag = 'scoped memory for tpu_custom_call.1']
    #allocation6 [shape = 'u8[32768]{0}', space=vmem, size = 0x8000, scoped, tag = 'input window, operand 5, single buffered']
    #allocation7 [shape = 's32[1]{0}', space=sflag, size = 0x4, scoped, tag = 'scoped memory for tpu_custom_call.1']
    #allocation8 [shape = 'u8[1024]{0}', space=vmem, size = 0x400, scoped, tag = 'input window, operand 8, single buffered']
    #allocation9 [shape = 'u8[512]{0}', space=vmem, size = 0x400, scoped, tag = 'input window, operand 9, single buffered']
    #allocation10 [shape = 's32[1]{0}', space=sflag, size = 0x4, scoped, tag = 'scoped memory for tpu_custom_call.1']
    #allocation11 [shape = 'u8[512]{0}', space=vmem, size = 0x400, scoped, tag = 'input window, operand 12, single buffered']
    #allocation12 [shape = 'u8[8192]{0}', space=vmem, size = 0x2000, scoped, tag = 'output window, operand 0, single buffered']
    %22 = vsyncpa [#allocation4], 0
    %23 = vsyncpa [#allocation7], 0
    %24 = vsyncpa [#allocation10], 0
    %25 = vsyncpa [#allocation5], 0
    // Predicated region
    $region2: #{tpu_custom_call.1} parent=1 // pred_check
      _
    $region3: #{tpu_custom_call.1} parent=1 // pred_check_branch
      %27 = sbr.rel (0) target = $region5
    $region4: #{tpu_custom_call.1} parent=1 // pred_region
      %s29 = ssub.s32 256, 256
      %30 = vsyncadd [#allocation4], %s29
      %s31 = sshll.u32 [#allocation3], 4
      %s32 = int_to_ptr.vmem [resolvable:$true] %s31
      %37 = dma.hbm_to_vmem [thread:$0]  %s0, 256, %s32, [#allocation4], 128, 128, 8
    $region5: #{tpu_custom_call.1} parent=1 // pred_fallthru
      _
    // Predicated region
    $region6: #{tpu_custom_call.1} parent=1 // pred_check
      _
    $region7: #{tpu_custom_call.1} parent=1 // pred_check_branch
      %39 = sbr.rel (0) target = $region9
    $region8: #{tpu_custom_call.1} parent=1 // pred_region
      _
    $region9: #{tpu_custom_call.1} parent=1 // pred_fallthru
      _
    // Predicated region
    $region10: #{tpu_custom_call.1} parent=1 // pred_check
      _
    $region11: #{tpu_custom_call.1} parent=1 // pred_check_branch
      %41 = sbr.rel (0) target = $region13
    $region12: #{tpu_custom_call.1} parent=1 // pred_region
      _
    $region13: #{tpu_custom_call.1} parent=1 // pred_fallthru
      _
    // Predicated region
    $region14: #{tpu_custom_call.1} parent=1 // pred_check
      _
    $region15: #{tpu_custom_call.1} parent=1 // pred_check_branch
      %43 = sbr.rel (0) target = $region17
    $region16: #{tpu_custom_call.1} parent=1 // pred_region
      _
    $region17: #{tpu_custom_call.1} parent=1 // pred_fallthru
      _
    // Predicated region
    $region18: #{tpu_custom_call.1} parent=1 // pred_check
      _
    $region19: #{tpu_custom_call.1} parent=1 // pred_check_branch
      %45 = sbr.rel (0) target = $region21
    $region20: #{tpu_custom_call.1} parent=1 // pred_region
      _
    $region21: #{tpu_custom_call.1} parent=1 // pred_fallthru
      _
    // Predicated region
    $region22: #{tpu_custom_call.1} parent=1 // pred_check
      _
    $region23: #{tpu_custom_call.1} parent=1 // pred_check_branch
      %47 = sbr.rel (0) target = $region25
    $region24: #{tpu_custom_call.1} parent=1 // pred_region
      %s49 = ssub.s32 1024, 1024
      %50 = vsyncadd [#allocation7], %s49
      %s51 = sshll.u32 [#allocation6], 4
      %s52 = int_to_ptr.vmem [resolvable:$true] %s51
      %57 = dma.hbm_to_vmem [thread:$0]  %s5, 1024, %s52, [#allocation7], 256, 256, 16
    $region25: #{tpu_custom_call.1} parent=1 // pred_fallthru
      _
    // Predicated region
    $region26: #{tpu_custom_call.1} parent=1 // pred_check
      _
    $region27: #{tpu_custom_call.1} parent=1 // pred_check_branch
      %59 = sbr.rel (0) target = $region29
    $region28: #{tpu_custom_call.1} parent=1 // pred_region
      _
    $region29: #{tpu_custom_call.1} parent=1 // pred_fallthru
      _
    // Predicated region
    $region30: #{tpu_custom_call.1} parent=1 // pred_check
      _
    $region31: #{tpu_custom_call.1} parent=1 // pred_check_branch
      %61 = sbr.rel (0) target = $region33
    $region32: #{tpu_custom_call.1} parent=1 // pred_region
      _
    $region33: #{tpu_custom_call.1} parent=1 // pred_fallthru
      _
    // Predicated region
    $region34: #{tpu_custom_call.1} parent=1 // pred_check
      _
    $region35: #{tpu_custom_call.1} parent=1 // pred_check_branch
      %63 = sbr.rel (0) target = $region37
    $region36: #{tpu_custom_call.1} parent=1 // pred_region
      %s65 = ssub.s32 32, 32
      %66 = vsyncadd [#allocation7], %s65
      %s68 = sshll.u32 [#allocation8], 4
      %s69 = int_to_ptr.vmem [resolvable:$true] %s68
      %71 = dma.hbm_to_vmem [thread:$0]  %s8, 32, %s69, [#allocation7]
    $region37: #{tpu_custom_call.1} parent=1 // pred_fallthru
      _
    // Predicated region
    $region38: #{tpu_custom_call.1} parent=1 // pred_check
      _
    $region39: #{tpu_custom_call.1} parent=1 // pred_check_branch
      %73 = sbr.rel (0) target = $region41
    $region40: #{tpu_custom_call.1} parent=1 // pred_region
      %s75 = ssub.s32 16, 16
      %76 = vsyncadd [#allocation10], %s75
      %s78 = sshll.u32 [#allocation9], 4
      %s79 = int_to_ptr.vmem [resolvable:$true] %s78
      %81 = dma.hbm_to_vmem [thread:$0]  %s9, 16, %s79, [#allocation10]
    $region41: #{tpu_custom_call.1} parent=1 // pred_fallthru
      _
    // Predicated region
    $region42: #{tpu_custom_call.1} parent=1 // pred_check
      _
    $region43: #{tpu_custom_call.1} parent=1 // pred_check_branch
      %83 = sbr.rel (0) target = $region45
    $region44: #{tpu_custom_call.1} parent=1 // pred_region
      _
    $region45: #{tpu_custom_call.1} parent=1 // pred_fallthru
      _
    // Predicated region
    $region46: #{tpu_custom_call.1} parent=1 // pred_check
      _
    $region47: #{tpu_custom_call.1} parent=1 // pred_check_branch
      %85 = sbr.rel (0) target = $region49
    $region48: #{tpu_custom_call.1} parent=1 // pred_region
      _
    $region49: #{tpu_custom_call.1} parent=1 // pred_fallthru
      _
    // Predicated region
    $region50: #{tpu_custom_call.1} parent=1 // pred_check
      _
    $region51: #{tpu_custom_call.1} parent=1 // pred_check_branch
      %87 = sbr.rel (0) target = $region53
    $region52: #{tpu_custom_call.1} parent=1 // pred_region
      %s89 = ssub.s32 16, 16
      %90 = vsyncadd [#allocation10], %s89
      %s92 = sshll.u32 [#allocation11], 4
      %s93 = int_to_ptr.vmem [resolvable:$true] %s92
      %95 = dma.hbm_to_vmem [thread:$0]  %s12, 16, %s93, [#allocation10]
    $region53: #{tpu_custom_call.1} parent=1 // pred_fallthru
      _
    // Predicated region
    $region54: #{tpu_custom_call.1} parent=1 // pred_check
      _
    $region55: #{tpu_custom_call.1} parent=1 // pred_check_branch
      %97 = sbr.rel (0) target = $region57
    $region56: #{tpu_custom_call.1} parent=1 // pred_region
      _
    $region57: #{tpu_custom_call.1} parent=1 // pred_fallthru
      _
    // Predicated region
    $region58: #{tpu_custom_call.1} parent=1 // pred_check
      _
    $region59: #{tpu_custom_call.1} parent=1 // pred_check_branch
      %99 = sbr.rel (0) target = $region61
    $region60: #{tpu_custom_call.1} parent=1 // pred_region
      _
    $region61: #{tpu_custom_call.1} parent=1 // pred_fallthru
      _
    // Predicated region
    $region62: #{tpu_custom_call.1} parent=1 // pred_check
      _
    $region63: #{tpu_custom_call.1} parent=1 // pred_check_branch
      %101 = sbr.rel (0) target = $region65
    $region64: #{tpu_custom_call.1} parent=1 // pred_region
      %102 = dma.done [#allocation4], 256
    $region65: #{tpu_custom_call.1} parent=1 // pred_fallthru
      _
    // Predicated region
    $region66: #{tpu_custom_call.1} parent=1 // pred_check
      _
    $region67: #{tpu_custom_call.1} parent=1 // pred_check_branch
      %104 = sbr.rel (0) target = $region69
    $region68: #{tpu_custom_call.1} parent=1 // pred_region
      %105 = dma.done [#allocation7], 1024
    $region69: #{tpu_custom_call.1} parent=1 // pred_fallthru
      _
    // Predicated region
    $region70: #{tpu_custom_call.1} parent=1 // pred_check
      _
    $region71: #{tpu_custom_call.1} parent=1 // pred_check_branch
      %107 = sbr.rel (0) target = $region73
    $region72: #{tpu_custom_call.1} parent=1 // pred_region
      %108 = dma.done [#allocation7], 32
    $region73: #{tpu_custom_call.1} parent=1 // pred_fallthru
      _
    // Predicated region
    $region74: #{tpu_custom_call.1} parent=1 // pred_check
      _
    $region75: #{tpu_custom_call.1} parent=1 // pred_check_branch
      %110 = sbr.rel (0) target = $region77
    $region76: #{tpu_custom_call.1} parent=1 // pred_region
      %111 = dma.done [#allocation10], 16
    $region77: #{tpu_custom_call.1} parent=1 // pred_fallthru
      _
    // Predicated region
    $region78: #{tpu_custom_call.1} parent=1 // pred_check
      _
    $region79: #{tpu_custom_call.1} parent=1 // pred_check_branch
      %113 = sbr.rel (0) target = $region81
    $region80: #{tpu_custom_call.1} parent=1 // pred_region
      %114 = dma.done [#allocation10], 16
    $region81: #{tpu_custom_call.1} parent=1 // pred_fallthru
      _
    %v115 = vld [vmem:[#allocation3] sm:$0xff]
    %v116 = vld [vmem:[#allocation3 + $0x8] sm:$0xff]
    %v117 = vld [vmem:[%s1] sm:$0x3]
    %v118 = vld [vmem:[%s1 + $0x2] sm:$0x3]
    %v119 = vld [vmem:[%s1 + $0x4] sm:$0x3]
    %v120 = vld [vmem:[%s1 + $0x6] sm:$0x3]
    %v121 = vld [vmem:[%s1 + $0x8] sm:$0x3]
    %v122 = vld [vmem:[%s1 + $0xa] sm:$0x3]
    %v123 = vld [vmem:[%s1 + $0xc] sm:$0x3]
    %v124 = vld [vmem:[%s1 + $0xe] sm:$0x3]
    %v125 = vld [vmem:[%s2] sm:$0x3]
    %v126 = vld [vmem:[%s2 + $0x2] sm:$0x3]
    %v127 = vld [vmem:[%s2 + $0x4] sm:$0x3]
    %v128 = vld [vmem:[%s2 + $0x6] sm:$0x3]
    %v129 = vld [vmem:[%s2 + $0x8] sm:$0x3]
    %v130 = vld [vmem:[%s2 + $0xa] sm:$0x3]
    %v131 = vld [vmem:[%s2 + $0xc] sm:$0x3]
    %v132 = vld [vmem:[%s2 + $0xe] sm:$0x3]
    %v133 = vld [vmem:[%s3] sm:$0xff]
    %v134 = vld [vmem:[%s3 + $0x8] sm:$0xff]
    %v135 = vld [vmem:[%s4] sm:$0xff]
    %v136 = vld [vmem:[%s4 + $0x8] sm:$0xff]
    %v137 = vld [vmem:[%s4 + $0x10] sm:$0xff]
    %v138 = vld [vmem:[%s4 + $0x18] sm:$0xff]
    %v139 = vld [vmem:[%s4 + $0x20] sm:$0xff]
    %v140 = vld [vmem:[%s4 + $0x28] sm:$0xff]
    %v141 = vld [vmem:[%s4 + $0x30] sm:$0xff]
    %v142 = vld [vmem:[%s4 + $0x38] sm:$0xff]
    %vm143 = vcmask 523264
    %v145 = vsel %vm143, %v115, 0
    %v148 = vsel %vm143, %v116, 0
    %150 = vmatprep.subr.mxu0 0.0
    %151 = vmatpush1.msra.mxu0 %v135
    %152 = vmatprep.subr.mxu0 0.0
    %153 = vmatpush1.msra.mxu0 %v136
    %154 = vmatprep.subr.mxu0 0.0
    %155 = vmatpush1.msra.mxu0 %v137
    %156 = vmatprep.subr.mxu0 0.0
    %157 = vmatpush1.msra.mxu0 %v138
    %158 = vmatprep.subr.mxu0 0.0
    %159 = vmatpush1.msra.mxu0 %v139
    %160 = vmatprep.subr.mxu0 0.0
    %161 = vmatpush1.msra.mxu0 %v140
    %162 = vmatprep.subr.mxu0 0.0
    %163 = vmatpush1.msra.mxu0 %v141
    %164 = vmatprep.subr.mxu0 0.0
    %165 = vmatpush1.msra.mxu0 %v142
    %166 = vmatprep.subr.mxu0 0.0
    %167 = vmatpush1.msra.mxu0 0.0
    %168 = vmatprep.subr.mxu0 0.0
    %169 = vmatpush1.msra.mxu0 0.0
    %170 = vmatprep.subr.mxu0 0.0
    %171 = vmatpush1.msra.mxu0 0.0
    %172 = vmatprep.subr.mxu0 0.0
    %173 = vmatpush1.msra.mxu0 0.0
    %174 = vmatprep.subr.mxu0 0.0
    %175 = vmatpush1.msra.mxu0 0.0
    %176 = vmatprep.subr.mxu0 0.0
    %177 = vmatpush1.msra.mxu0 0.0
    %178 = vmatprep.subr.mxu0 0.0
    %179 = vmatpush1.msra.mxu0 0.0
    %180 = vmatprep.subr.mxu0 0.0
    %181 = vmatpush1.msra.mxu0 0.0
    %182 = vmatprep.subr.mxu0 0.0
    %183 = vmatpush1.msra.mxu0 0.0
    %184 = vmatprep.subr.mxu0 0.0
    %185 = vmatpush1.msra.mxu0 0.0
    %186 = vmatprep.subr.mxu0 0.0
    %187 = vmatpush1.msra.mxu0 0.0
    %188 = vmatprep.subr.mxu0 0.0
    %189 = vmatpush1.msra.mxu0 0.0
    %190 = vmatprep.subr.mxu0 0.0
    %191 = vmatpush1.msra.mxu0 0.0
    %192 = vmatprep.subr.mxu0 0.0
    %193 = vmatpush1.msra.mxu0 0.0
    %194 = vmatprep.subr.mxu0 0.0
    %195 = vmatpush1.msra.mxu0 0.0
    %196 = vmatprep.subr.mxu0 0.0
    %197 = vmatpush1.msra.mxu0 0.0
    %198 = vmatprep.subr.mxu0 0.0
    %199 = vmatpush1.msra.mxu0 0.0
    %200 = vmatprep.subr.mxu0 0.0
    %201 = vmatpush1.msra.mxu0 0.0
    %202 = vmatprep.subr.mxu0 0.0
    %203 = vmatpush1.msra.mxu0 0.0
    %204 = vmatprep.subr.mxu0 0.0
    %205 = vmatpush1.msra.mxu0 0.0
    %206 = vmatprep.subr.mxu0 0.0
    %207 = vmatpush1.msra.mxu0 0.0
    %208 = vmatprep.subr.mxu0 0.0
    %209 = vmatpush1.msra.mxu0 0.0
    %210 = vmatprep.subr.mxu0 0.0
    %211 = vmatpush1.msra.mxu0 0.0
    %212 = vmatprep.subr.mxu0 0.0
    %213 = vmatpush1.msra.mxu0 0.0
    %214 = vmatprep.mubr.f32.mxu0 0.0
    %215 = vmatmul.mubr.f32.gmra.mrb[0].mxu0 %v145
    %v216 = vpop.f32.mrb[0].mxu0
    %v217 = vadd.f32 0.0, %v216
    %v218 = vpop.f32.mrb[0].mxu0
    %219 = vmatprep.mubr.f32.mxu0 0.0
    %220 = vmatmul.mubr.f32.gmra.mrb[0].mxu0 %v148
    %v221 = vpop.f32.mrb[0].mxu0
    %v222 = vadd.f32 0.0, %v221
    %v223 = vpop.f32.mrb[0].mxu0
    %224 = vdwg.mxu0
    %v227 = vcombine.high %v217, %v217
    %v229 = vunpack.c.l.s4 1983009808
    %v230 = vunpack.c.0.s8 %v229
    %v231 = vlaneseq
    %v232 = vshrl.u32 %v231, 7
    %v233 = vsub.s32 %v230, %v232
    %v234 = vrot.slane %v217, %v233
    %v236 = vunpack.c.l.s4 1983009808
    %v237 = vunpack.c.0.s8 %v236
    %v238 = vlaneseq
    %v239 = vshrl.u32 %v238, 7
    %v240 = vsub.s32 %v237, %v239
    %v241 = vrot.slane %v227, %v240
    %v242 = vcombine.high %v234, %v234
    %v243 = vcombine.high %v241, %v241
    %v244 = vcombine.high %v222, %v222
    %v246 = vunpack.c.l.s4 1983009808
    %v247 = vunpack.c.0.s8 %v246
    %v248 = vlaneseq
    %v249 = vshrl.u32 %v248, 7
    %v250 = vsub.s32 %v247, %v249
    %v251 = vrot.slane %v222, %v250
    %v253 = vunpack.c.l.s4 1983009808
    %v254 = vunpack.c.0.s8 %v253
    %v255 = vlaneseq
    %v256 = vshrl.u32 %v255, 7
    %v257 = vsub.s32 %v254, %v256
    %v258 = vrot.slane %v244, %v257
    %v259 = vcombine.high %v251, %v251
    %v260 = vcombine.high %v258, %v258
    %v269 = vld [vmem:[#allocation6] sm:$0xff]
    %v270 = vld [vmem:[#allocation6 + $0x8] sm:$0xff]
    %v271 = vld [vmem:[#allocation6 + $0x10] sm:$0xff]
    %v272 = vld [vmem:[#allocation6 + $0x18] sm:$0xff]
    %v273 = vld [vmem:[#allocation6 + $0x20] sm:$0xff]
    %v274 = vld [vmem:[#allocation6 + $0x28] sm:$0xff]
    %v275 = vld [vmem:[#allocation6 + $0x30] sm:$0xff]
    %v276 = vld [vmem:[#allocation6 + $0x38] sm:$0xff]
    %v277 = vld [vmem:[%s7] sm:$0x3]
    %v279 = vlaneseq
    %v280 = vshrl.u32 %v279, 7
    %v281 = vsub.s32 0, %v280
    %v282 = vrot.slane %v277, %v281
    %v283 = vlaneseq
    %v284 = vshrl.u32 %v283, 7
    %v285 = vsub.s32 1, %v284
    %v286 = vrot.slane %v277, %v285
    %vm289 = vcmask 261120
    %v290 = vsel %vm289, %v217, 0
    %v292 = vsel %vm289, %v222, 0
    %294 = vmatprep.subr.mxu0 %v270
    %295 = vmatpush1.msra.mxu0 %v269
    %296 = vmatprep.subr.mxu0 %v272
    %297 = vmatpush1.msra.mxu0 %v271
    %298 = vmatprep.subr.mxu0 %v274
    %299 = vmatpush1.msra.mxu0 %v273
    %300 = vmatprep.subr.mxu0 %v276
    %301 = vmatpush1.msra.mxu0 %v275
    %302 = vmatprep.subr.mxu0 0.0
    %303 = vmatpush1.msra.mxu0 0.0
    %304 = vmatprep.subr.mxu0 0.0
    %305 = vmatpush1.msra.mxu0 0.0
    %306 = vmatprep.subr.mxu0 0.0
    %307 = vmatpush1.msra.mxu0 0.0
    %308 = vmatprep.subr.mxu0 0.0
    %309 = vmatpush1.msra.mxu0 0.0
    %310 = vmatprep.subr.mxu0 0.0
    %311 = vmatpush1.msra.mxu0 0.0
    %312 = vmatprep.subr.mxu0 0.0
    %313 = vmatpush1.msra.mxu0 0.0
    %314 = vmatprep.subr.mxu0 0.0
    %315 = vmatpush1.msra.mxu0 0.0
    %316 = vmatprep.subr.mxu0 0.0
    %317 = vmatpush1.msra.mxu0 0.0
    %318 = vmatprep.subr.mxu0 0.0
    %319 = vmatpush1.msra.mxu0 0.0
    %320 = vmatprep.subr.mxu0 0.0
    %321 = vmatpush1.msra.mxu0 0.0
    %322 = vmatprep.subr.mxu0 0.0
    %323 = vmatpush1.msra.mxu0 0.0
    %324 = vmatprep.subr.mxu0 0.0
    %325 = vmatpush1.msra.mxu0 0.0
    %326 = vmatprep.subr.mxu0 0.0
    %327 = vmatpush1.msra.mxu0 0.0
    %328 = vmatprep.subr.mxu0 0.0
    %329 = vmatpush1.msra.mxu0 0.0
    %330 = vmatprep.subr.mxu0 0.0
    %331 = vmatpush1.msra.mxu0 0.0
    %332 = vmatprep.subr.mxu0 0.0
    %333 = vmatpush1.msra.mxu0 0.0
    %334 = vmatprep.subr.mxu0 0.0
    %335 = vmatpush1.msra.mxu0 0.0
    %336 = vmatprep.subr.mxu0 0.0
    %337 = vmatpush1.msra.mxu0 0.0
    %338 = vmatprep.subr.mxu0 0.0
    %339 = vmatpush1.msra.mxu0 0.0
    %340 = vmatprep.subr.mxu0 0.0
    %341 = vmatpush1.msra.mxu0 0.0
    %342 = vmatprep.subr.mxu0 0.0
    %343 = vmatpush1.msra.mxu0 0.0
    %344 = vmatprep.subr.mxu0 0.0
    %345 = vmatpush1.msra.mxu0 0.0
    %346 = vmatprep.subr.mxu0 0.0
    %347 = vmatpush1.msra.mxu0 0.0
    %348 = vmatprep.subr.mxu0 0.0
    %349 = vmatpush1.msra.mxu0 0.0
    %350 = vmatprep.subr.mxu0 0.0
    %351 = vmatpush1.msra.mxu0 0.0
    %352 = vmatprep.subr.mxu0 0.0
    %353 = vmatpush1.msra.mxu0 0.0
    %354 = vmatprep.subr.mxu0 0.0
    %355 = vmatpush1.msra.mxu0 0.0
    %356 = vmatprep.subr.mxu0 0.0
    %357 = vmatpush1.msra.mxu0 0.0
    %358 = vmatprep.mubr.f32.mxu0 0.0
    %359 = vmatmul.mubr.f32.gmra.mrb[0].mxu0 %v290
    %v360 = vpop.f32.mrb[0].mxu0
    %v361 = vadd.f32 %v282, %v360
    %v362 = vpop.f32.mrb[0].mxu0
    %v363 = vadd.f32 %v286, %v362
    %364 = vmatprep.mubr.f32.mxu0 0.0
    %365 = vmatmul.mubr.f32.gmra.mrb[0].mxu0 %v292
    %v366 = vpop.f32.mrb[0].mxu0
    %v367 = vadd.f32 %v282, %v366
    %v368 = vpop.f32.mrb[0].mxu0
    %v369 = vadd.f32 %v286, %v368
    %370 = vdwg.mxu0
    %v375 = vcombine.low %v361, %v363
    %v376 = vcombine.high %v361, %v363
    %v378 = vunpack.c.l.s4 1983009808
    %v379 = vunpack.c.0.s8 %v378
    %v380 = vlaneseq
    %v381 = vshrl.u32 %v380, 7
    %v382 = vsub.s32 %v379, %v381
    %v383 = vrot.slane %v375, %v382
    %v385 = vunpack.c.l.s4 1983009808
    %v386 = vunpack.c.0.s8 %v385
    %v387 = vlaneseq
    %v388 = vshrl.u32 %v387, 7
    %v389 = vsub.s32 %v386, %v388
    %v390 = vrot.slane %v376, %v389
    %v391 = vcombine.high %v383, %v383
    %v392 = vcombine.high %v390, %v390
    %v393 = vcombine.low %v367, %v369
    %v394 = vcombine.high %v367, %v369
    %v396 = vunpack.c.l.s4 1983009808
    %v397 = vunpack.c.0.s8 %v396
    %v398 = vlaneseq
    %v399 = vshrl.u32 %v398, 7
    %v400 = vsub.s32 %v397, %v399
    %v401 = vrot.slane %v393, %v400
    %v403 = vunpack.c.l.s4 1983009808
    %v404 = vunpack.c.0.s8 %v403
    %v405 = vlaneseq
    %v406 = vshrl.u32 %v405, 7
    %v407 = vsub.s32 %v404, %v406
    %v408 = vrot.slane %v394, %v407
    %v409 = vcombine.high %v401, %v401
    %v410 = vcombine.high %v408, %v408
    %v419 = vld [vmem:[%s6] sm:$0xff]
    %v420 = vld [vmem:[%s6 + $0x8] sm:$0xff]
    %v421 = vld [vmem:[%s6 + $0x10] sm:$0xff]
    %v422 = vld [vmem:[%s6 + $0x18] sm:$0xff]
    %v423 = vld [vmem:[%s6 + $0x20] sm:$0xff]
    %v424 = vld [vmem:[%s6 + $0x28] sm:$0xff]
    %v425 = vld [vmem:[%s6 + $0x30] sm:$0xff]
    %v426 = vld [vmem:[%s6 + $0x38] sm:$0xff]
    %v427 = vld [vmem:[%s6 + $0x40] sm:$0xff]
    %v428 = vld [vmem:[%s6 + $0x48] sm:$0xff]
    %v429 = vld [vmem:[%s6 + $0x50] sm:$0xff]
    %v430 = vld [vmem:[%s6 + $0x58] sm:$0xff]
    %v431 = vld [vmem:[%s6 + $0x60] sm:$0xff]
    %v432 = vld [vmem:[%s6 + $0x68] sm:$0xff]
    %v433 = vld [vmem:[%s6 + $0x70] sm:$0xff]
    %v434 = vld [vmem:[%s6 + $0x78] sm:$0xff]
    %v435 = vld [vmem:[#allocation8] sm:$0x3]
    %v437 = vlaneseq
    %v438 = vshrl.u32 %v437, 7
    %v439 = vsub.s32 0, %v438
    %v440 = vrot.slane %v435, %v439
    %v441 = vlaneseq
    %v442 = vshrl.u32 %v441, 7
    %v443 = vsub.s32 1, %v442
    %v444 = vrot.slane %v435, %v443
    %v448 = vsel %vm143, 0.0, 0
    %450 = vmatprep.subr.mxu0 %v420
    %451 = vmatpush1.msra.mxu0 %v419
    %452 = vmatprep.subr.mxu0 %v422
    %453 = vmatpush1.msra.mxu0 %v421
    %454 = vmatprep.subr.mxu0 %v424
    %455 = vmatpush1.msra.mxu0 %v423
    %456 = vmatprep.subr.mxu0 %v426
    %457 = vmatpush1.msra.mxu0 %v425
    %458 = vmatprep.subr.mxu0 %v428
    %459 = vmatpush1.msra.mxu0 %v427
    %460 = vmatprep.subr.mxu0 %v430
    %461 = vmatpush1.msra.mxu0 %v429
    %462 = vmatprep.subr.mxu0 %v432
    %463 = vmatpush1.msra.mxu0 %v431
    %464 = vmatprep.subr.mxu0 %v434
    %465 = vmatpush1.msra.mxu0 %v433
    %466 = vmatprep.subr.mxu0 0.0
    %467 = vmatpush1.msra.mxu0 0.0
    %468 = vmatprep.subr.mxu0 0.0
    %469 = vmatpush1.msra.mxu0 0.0
    %470 = vmatprep.subr.mxu0 0.0
    %471 = vmatpush1.msra.mxu0 0.0
    %472 = vmatprep.subr.mxu0 0.0
    %473 = vmatpush1.msra.mxu0 0.0
    %474 = vmatprep.subr.mxu0 0.0
    %475 = vmatpush1.msra.mxu0 0.0
    %476 = vmatprep.subr.mxu0 0.0
    %477 = vmatpush1.msra.mxu0 0.0
    %478 = vmatprep.subr.mxu0 0.0
    %479 = vmatpush1.msra.mxu0 0.0
    %480 = vmatprep.subr.mxu0 0.0
    %481 = vmatpush1.msra.mxu0 0.0
    %482 = vmatprep.subr.mxu0 0.0
    %483 = vmatpush1.msra.mxu0 0.0
    %484 = vmatprep.subr.mxu0 0.0
    %485 = vmatpush1.msra.mxu0 0.0
    %486 = vmatprep.subr.mxu0 0.0
    %487 = vmatpush1.msra.mxu0 0.0
    %488 = vmatprep.subr.mxu0 0.0
    %489 = vmatpush1.msra.mxu0 0.0
    %490 = vmatprep.subr.mxu0 0.0
    %491 = vmatpush1.msra.mxu0 0.0
    %492 = vmatprep.subr.mxu0 0.0
    %493 = vmatpush1.msra.mxu0 0.0
    %494 = vmatprep.subr.mxu0 0.0
    %495 = vmatpush1.msra.mxu0 0.0
    %496 = vmatprep.subr.mxu0 0.0
    %497 = vmatpush1.msra.mxu0 0.0
    %498 = vmatprep.subr.mxu0 0.0
    %499 = vmatpush1.msra.mxu0 0.0
    %500 = vmatprep.subr.mxu0 0.0
    %501 = vmatpush1.msra.mxu0 0.0
    %502 = vmatprep.subr.mxu0 0.0
    %503 = vmatpush1.msra.mxu0 0.0
    %504 = vmatprep.subr.mxu0 0.0
    %505 = vmatpush1.msra.mxu0 0.0
    %506 = vmatprep.subr.mxu0 0.0
    %507 = vmatpush1.msra.mxu0 0.0
    %508 = vmatprep.subr.mxu0 0.0
    %509 = vmatpush1.msra.mxu0 0.0
    %510 = vmatprep.subr.mxu0 0.0
    %511 = vmatpush1.msra.mxu0 0.0
    %512 = vmatprep.subr.mxu0 0.0
    %513 = vmatpush1.msra.mxu0 0.0
    %514 = vmatprep.mubr.f32.mxu0 0.0
    %515 = vmatmul.mubr.f32.gmra.mrb[0].mxu0 %v448
    %v516 = vpop.f32.mrb[0].mxu0
    %v517 = vadd.f32 %v440, %v516
    %v518 = vpop.f32.mrb[0].mxu0
    %v519 = vadd.f32 %v444, %v518
    %520 = vdwg.mxu0
    %v521 = vadd.f32 %v383, %v517
    %v522 = vxor.u32 %v521, 2147483648
    %v523 = vmul.f32 %v522, 1.442695
    %v524 = vpow.pop %v523
    %v525 = vadd.f32 %v524, 1.0
    %v526 = vrcp.pop %v525
    %v527 = vmul.f32 1.0, %v526
    %v528 = vmul.f32 %v527, %v519
    %v529 = vrot.slane %v383, 2
    %v531 = vadd.f32 %v529, %v528
    %v532 = vtanh.pop %v531
    %v533 = vsub.f32 1.0, %v527
    %535 = vrot.lane.b32.xlu0 %v532, 64
    %v536 = vpop.permute.xlu0 %535
    %v538 = vmul.f32 %v533, %v536
    %v539 = vmul.f32 %v527, 0.0
    %v540 = vadd.f32 %v538, %v539
    %v543 = vunpack.c.l.s4 1983009808
    %v544 = vunpack.c.0.s8 %v543
    %v545 = vlaneseq
    %v546 = vshrl.u32 %v545, 7
    %v547 = vsub.s32 %v544, %v546
    %v548 = vrot.slane %v540, %v547
    %549 = vrot.lane.b32.xlu0 %v548, 64
    %v550 = vpop.permute.xlu0 %549
    %v551 = vsel %vm143, %v550, 0
    %553 = vmatprep.subr.mxu0 %v420
    %554 = vmatpush1.msra.mxu0 %v419
    %555 = vmatprep.subr.mxu0 %v422
    %556 = vmatpush1.msra.mxu0 %v421
    %557 = vmatprep.subr.mxu0 %v424
    %558 = vmatpush1.msra.mxu0 %v423
    %559 = vmatprep.subr.mxu0 %v426
    %560 = vmatpush1.msra.mxu0 %v425
    %561 = vmatprep.subr.mxu0 %v428
    %562 = vmatpush1.msra.mxu0 %v427
    %563 = vmatprep.subr.mxu0 %v430
    %564 = vmatpush1.msra.mxu0 %v429
    %565 = vmatprep.subr.mxu0 %v432
    %566 = vmatpush1.msra.mxu0 %v431
    %567 = vmatprep.subr.mxu0 %v434
    %568 = vmatpush1.msra.mxu0 %v433
    %569 = vmatprep.subr.mxu0 0.0
    %570 = vmatpush1.msra.mxu0 0.0
    %571 = vmatprep.subr.mxu0 0.0
    %572 = vmatpush1.msra.mxu0 0.0
    %573 = vmatprep.subr.mxu0 0.0
    %574 = vmatpush1.msra.mxu0 0.0
    %575 = vmatprep.subr.mxu0 0.0
    %576 = vmatpush1.msra.mxu0 0.0
    %577 = vmatprep.subr.mxu0 0.0
    %578 = vmatpush1.msra.mxu0 0.0
    %579 = vmatprep.subr.mxu0 0.0
    %580 = vmatpush1.msra.mxu0 0.0
    %581 = vmatprep.subr.mxu0 0.0
    %582 = vmatpush1.msra.mxu0 0.0
    %583 = vmatprep.subr.mxu0 0.0
    %584 = vmatpush1.msra.mxu0 0.0
    %585 = vmatprep.subr.mxu0 0.0
    %586 = vmatpush1.msra.mxu0 0.0
    %587 = vmatprep.subr.mxu0 0.0
    %588 = vmatpush1.msra.mxu0 0.0
    %589 = vmatprep.subr.mxu0 0.0
    %590 = vmatpush1.msra.mxu0 0.0
    %591 = vmatprep.subr.mxu0 0.0
    %592 = vmatpush1.msra.mxu0 0.0
    %593 = vmatprep.subr.mxu0 0.0
    %594 = vmatpush1.msra.mxu0 0.0
    %595 = vmatprep.subr.mxu0 0.0
    %596 = vmatpush1.msra.mxu0 0.0
    %597 = vmatprep.subr.mxu0 0.0
    %598 = vmatpush1.msra.mxu0 0.0
    %599 = vmatprep.subr.mxu0 0.0
    %600 = vmatpush1.msra.mxu0 0.0
    %601 = vmatprep.subr.mxu0 0.0
    %602 = vmatpush1.msra.mxu0 0.0
    %603 = vmatprep.subr.mxu0 0.0
    %604 = vmatpush1.msra.mxu0 0.0
    %605 = vmatprep.subr.mxu0 0.0
    %606 = vmatpush1.msra.mxu0 0.0
    %607 = vmatprep.subr.mxu0 0.0
    %608 = vmatpush1.msra.mxu0 0.0
    %609 = vmatprep.subr.mxu0 0.0
    %610 = vmatpush1.msra.mxu0 0.0
    %611 = vmatprep.subr.mxu0 0.0
    %612 = vmatpush1.msra.mxu0 0.0
    %613 = vmatprep.subr.mxu0 0.0
    %614 = vmatpush1.msra.mxu0 0.0
    %615 = vmatprep.subr.mxu0 0.0
    %616 = vmatpush1.msra.mxu0 0.0
    %617 = vmatprep.mubr.f32.mxu0 0.0
    %618 = vmatmul.mubr.f32.gmra.mrb[0].mxu0 %v551
    %v619 = vpop.f32.mrb[0].mxu0
    %v620 = vadd.f32 %v440, %v619
    %v621 = vpop.f32.mrb[0].mxu0
    %v622 = vadd.f32 %v444, %v621
    %623 = vdwg.mxu0
    %v624 = vadd.f32 %v391, %v620
    %v625 = vxor.u32 %v624, 2147483648
    %v626 = vmul.f32 %v625, 1.442695
    %v627 = vpow.pop %v626
    %v628 = vadd.f32 %v627, 1.0
    %v629 = vrcp.pop %v628
    %v630 = vmul.f32 1.0, %v629
    %v631 = vmul.f32 %v630, %v622
    %v632 = vrot.slane %v391, 2
    %v634 = vadd.f32 %v632, %v631
    %v635 = vtanh.pop %v634
    %v636 = vsub.f32 1.0, %v630
    %638 = vrot.lane.b32.xlu0 %v635, 64
    %v639 = vpop.permute.xlu0 %638
    %v641 = vmul.f32 %v636, %v639
    %v642 = vmul.f32 %v630, %v540
    %v643 = vadd.f32 %v641, %v642
    %v646 = vunpack.c.l.s4 1983009808
    %v647 = vunpack.c.0.s8 %v646
    %v648 = vlaneseq
    %v649 = vshrl.u32 %v648, 7
    %v650 = vsub.s32 %v647, %v649
    %v651 = vrot.slane %v643, %v650
    %652 = vrot.lane.b32.xlu0 %v651, 64
    %v653 = vpop.permute.xlu0 %652
    %v654 = vsel %vm143, %v653, 0
    %656 = vmatprep.subr.mxu0 %v420
    %657 = vmatpush1.msra.mxu0 %v419
    %658 = vmatprep.subr.mxu0 %v422
    %659 = vmatpush1.msra.mxu0 %v421
    %660 = vmatprep.subr.mxu0 %v424
    %661 = vmatpush1.msra.mxu0 %v423
    %662 = vmatprep.subr.mxu0 %v426
    %663 = vmatpush1.msra.mxu0 %v425
    %664 = vmatprep.subr.mxu0 %v428
    %665 = vmatpush1.msra.mxu0 %v427
    %666 = vmatprep.subr.mxu0 %v430
    %667 = vmatpush1.msra.mxu0 %v429
    %668 = vmatprep.subr.mxu0 %v432
    %669 = vmatpush1.msra.mxu0 %v431
    %670 = vmatprep.subr.mxu0 %v434
    %671 = vmatpush1.msra.mxu0 %v433
    %672 = vmatprep.subr.mxu0 0.0
    %673 = vmatpush1.msra.mxu0 0.0
    %674 = vmatprep.subr.mxu0 0.0
    %675 = vmatpush1.msra.mxu0 0.0
    %676 = vmatprep.subr.mxu0 0.0
    %677 = vmatpush1.msra.mxu0 0.0
    %678 = vmatprep.subr.mxu0 0.0
    %679 = vmatpush1.msra.mxu0 0.0
    %680 = vmatprep.subr.mxu0 0.0
    %681 = vmatpush1.msra.mxu0 0.0
    %682 = vmatprep.subr.mxu0 0.0
    %683 = vmatpush1.msra.mxu0 0.0
    %684 = vmatprep.subr.mxu0 0.0
    %685 = vmatpush1.msra.mxu0 0.0
    %686 = vmatprep.subr.mxu0 0.0
    %687 = vmatpush1.msra.mxu0 0.0
    %688 = vmatprep.subr.mxu0 0.0
    %689 = vmatpush1.msra.mxu0 0.0
    %690 = vmatprep.subr.mxu0 0.0
    %691 = vmatpush1.msra.mxu0 0.0
    %692 = vmatprep.subr.mxu0 0.0
    %693 = vmatpush1.msra.mxu0 0.0
    %694 = vmatprep.subr.mxu0 0.0
    %695 = vmatpush1.msra.mxu0 0.0
    %696 = vmatprep.subr.mxu0 0.0
    %697 = vmatpush1.msra.mxu0 0.0
    %698 = vmatprep.subr.mxu0 0.0
    %699 = vmatpush1.msra.mxu0 0.0
    %700 = vmatprep.subr.mxu0 0.0
    %701 = vmatpush1.msra.mxu0 0.0
    %702 = vmatprep.subr.mxu0 0.0
    %703 = vmatpush1.msra.mxu0 0.0
    %704 = vmatprep.subr.mxu0 0.0
    %705 = vmatpush1.msra.mxu0 0.0
    %706 = vmatprep.subr.mxu0 0.0
    %707 = vmatpush1.msra.mxu0 0.0
    %708 = vmatprep.subr.mxu0 0.0
    %709 = vmatpush1.msra.mxu0 0.0
    %710 = vmatprep.subr.mxu0 0.0
    %711 = vmatpush1.msra.mxu0 0.0
    %712 = vmatprep.subr.mxu0 0.0
    %713 = vmatpush1.msra.mxu0 0.0
    %714 = vmatprep.subr.mxu0 0.0
    %715 = vmatpush1.msra.mxu0 0.0
    %716 = vmatprep.subr.mxu0 0.0
    %717 = vmatpush1.msra.mxu0 0.0
    %718 = vmatprep.subr.mxu0 0.0
    %719 = vmatpush1.msra.mxu0 0.0
    %720 = vmatprep.mubr.f32.mxu0 0.0
    %721 = vmatmul.mubr.f32.gmra.mrb[0].mxu0 %v654
    %v722 = vpop.f32.mrb[0].mxu0
    %v723 = vadd.f32 %v440, %v722
    %v724 = vpop.f32.mrb[0].mxu0
    %v725 = vadd.f32 %v444, %v724
    %726 = vdwg.mxu0
    %v727 = vadd.f32 %v390, %v723
    %v728 = vxor.u32 %v727, 2147483648
    %v729 = vmul.f32 %v728, 1.442695
    %v730 = vpow.pop %v729
    %v731 = vadd.f32 %v730, 1.0
    %v732 = vrcp.pop %v731
    %v733 = vmul.f32 1.0, %v732
    %v734 = vmul.f32 %v733, %v725
    %v735 = vrot.slane %v390, 2
    %v737 = vadd.f32 %v735, %v734
    %v738 = vtanh.pop %v737
    %v739 = vsub.f32 1.0, %v733
    %741 = vrot.lane.b32.xlu0 %v738, 64
    %v742 = vpop.permute.xlu0 %741
    %v744 = vmul.f32 %v739, %v742
    %v745 = vmul.f32 %v733, %v643
    %v746 = vadd.f32 %v744, %v745
    %v749 = vunpack.c.l.s4 1983009808
    %v750 = vunpack.c.0.s8 %v749
    %v751 = vlaneseq
    %v752 = vshrl.u32 %v751, 7
    %v753 = vsub.s32 %v750, %v752
    %v754 = vrot.slane %v746, %v753
    %755 = vrot.lane.b32.xlu0 %v754, 64
    %v756 = vpop.permute.xlu0 %755
    %v757 = vsel %vm143, %v756, 0
    %759 = vmatprep.subr.mxu0 %v420
    %760 = vmatpush1.msra.mxu0 %v419
    %761 = vmatprep.subr.mxu0 %v422
    %762 = vmatpush1.msra.mxu0 %v421
    %763 = vmatprep.subr.mxu0 %v424
    %764 = vmatpush1.msra.mxu0 %v423
    %765 = vmatprep.subr.mxu0 %v426
    %766 = vmatpush1.msra.mxu0 %v425
    %767 = vmatprep.subr.mxu0 %v428
    %768 = vmatpush1.msra.mxu0 %v427
    %769 = vmatprep.subr.mxu0 %v430
    %770 = vmatpush1.msra.mxu0 %v429
    %771 = vmatprep.subr.mxu0 %v432
    %772 = vmatpush1.msra.mxu0 %v431
    %773 = vmatprep.subr.mxu0 %v434
    %774 = vmatpush1.msra.mxu0 %v433
    %775 = vmatprep.subr.mxu0 0.0
    %776 = vmatpush1.msra.mxu0 0.0
    %777 = vmatprep.subr.mxu0 0.0
    %778 = vmatpush1.msra.mxu0 0.0
    %779 = vmatprep.subr.mxu0 0.0
    %780 = vmatpush1.msra.mxu0 0.0
    %781 = vmatprep.subr.mxu0 0.0
    %782 = vmatpush1.msra.mxu0 0.0
    %783 = vmatprep.subr.mxu0 0.0
    %784 = vmatpush1.msra.mxu0 0.0
    %785 = vmatprep.subr.mxu0 0.0
    %786 = vmatpush1.msra.mxu0 0.0
    %787 = vmatprep.subr.mxu0 0.0
    %788 = vmatpush1.msra.mxu0 0.0
    %789 = vmatprep.subr.mxu0 0.0
    %790 = vmatpush1.msra.mxu0 0.0
    %791 = vmatprep.subr.mxu0 0.0
    %792 = vmatpush1.msra.mxu0 0.0
    %793 = vmatprep.subr.mxu0 0.0
    %794 = vmatpush1.msra.mxu0 0.0
    %795 = vmatprep.subr.mxu0 0.0
    %796 = vmatpush1.msra.mxu0 0.0
    %797 = vmatprep.subr.mxu0 0.0
    %798 = vmatpush1.msra.mxu0 0.0
    %799 = vmatprep.subr.mxu0 0.0
    %800 = vmatpush1.msra.mxu0 0.0
    %801 = vmatprep.subr.mxu0 0.0
    %802 = vmatpush1.msra.mxu0 0.0
    %803 = vmatprep.subr.mxu0 0.0
    %804 = vmatpush1.msra.mxu0 0.0
    %805 = vmatprep.subr.mxu0 0.0
    %806 = vmatpush1.msra.mxu0 0.0
    %807 = vmatprep.subr.mxu0 0.0
    %808 = vmatpush1.msra.mxu0 0.0
    %809 = vmatprep.subr.mxu0 0.0
    %810 = vmatpush1.msra.mxu0 0.0
    %811 = vmatprep.subr.mxu0 0.0
    %812 = vmatpush1.msra.mxu0 0.0
    %813 = vmatprep.subr.mxu0 0.0
    %814 = vmatpush1.msra.mxu0 0.0
    %815 = vmatprep.subr.mxu0 0.0
    %816 = vmatpush1.msra.mxu0 0.0
    %817 = vmatprep.subr.mxu0 0.0
    %818 = vmatpush1.msra.mxu0 0.0
    %819 = vmatprep.subr.mxu0 0.0
    %820 = vmatpush1.msra.mxu0 0.0
    %821 = vmatprep.subr.mxu0 0.0
    %822 = vmatpush1.msra.mxu0 0.0
    %823 = vmatprep.mubr.f32.mxu0 0.0
    %824 = vmatmul.mubr.f32.gmra.mrb[0].mxu0 %v757
    %v825 = vpop.f32.mrb[0].mxu0
    %v826 = vadd.f32 %v440, %v825
    %v827 = vpop.f32.mrb[0].mxu0
    %v828 = vadd.f32 %v444, %v827
    %829 = vdwg.mxu0
    %v830 = vadd.f32 %v392, %v826
    %v831 = vxor.u32 %v830, 2147483648
    %v832 = vmul.f32 %v831, 1.442695
    %v833 = vpow.pop %v832
    %v834 = vadd.f32 %v833, 1.0
    %v835 = vrcp.pop %v834
    %v836 = vmul.f32 1.0, %v835
    %v837 = vmul.f32 %v836, %v828
    %v838 = vrot.slane %v392, 2
    %v840 = vadd.f32 %v838, %v837
    %v841 = vtanh.pop %v840
    %v842 = vsub.f32 1.0, %v836
    %844 = vrot.lane.b32.xlu0 %v841, 64
    %v845 = vpop.permute.xlu0 %844
    %v847 = vmul.f32 %v842, %v845
    %v848 = vmul.f32 %v836, %v746
    %v849 = vadd.f32 %v847, %v848
    %v852 = vunpack.c.l.s4 1983009808
    %v853 = vunpack.c.0.s8 %v852
    %v854 = vlaneseq
    %v855 = vshrl.u32 %v854, 7
    %v856 = vsub.s32 %v853, %v855
    %v857 = vrot.slane %v849, %v856
    %858 = vrot.lane.b32.xlu0 %v857, 64
    %v859 = vpop.permute.xlu0 %858
    %v860 = vsel %vm143, %v859, 0
    %862 = vmatprep.subr.mxu0 %v420
    %863 = vmatpush1.msra.mxu0 %v419
    %864 = vmatprep.subr.mxu0 %v422
    %865 = vmatpush1.msra.mxu0 %v421
    %866 = vmatprep.subr.mxu0 %v424
    %867 = vmatpush1.msra.mxu0 %v423
    %868 = vmatprep.subr.mxu0 %v426
    %869 = vmatpush1.msra.mxu0 %v425
    %870 = vmatprep.subr.mxu0 %v428
    %871 = vmatpush1.msra.mxu0 %v427
    %872 = vmatprep.subr.mxu0 %v430
    %873 = vmatpush1.msra.mxu0 %v429
    %874 = vmatprep.subr.mxu0 %v432
    %875 = vmatpush1.msra.mxu0 %v431
    %876 = vmatprep.subr.mxu0 %v434
    %877 = vmatpush1.msra.mxu0 %v433
    %878 = vmatprep.subr.mxu0 0.0
    %879 = vmatpush1.msra.mxu0 0.0
    %880 = vmatprep.subr.mxu0 0.0
    %881 = vmatpush1.msra.mxu0 0.0
    %882 = vmatprep.subr.mxu0 0.0
    %883 = vmatpush1.msra.mxu0 0.0
    %884 = vmatprep.subr.mxu0 0.0
    %885 = vmatpush1.msra.mxu0 0.0
    %886 = vmatprep.subr.mxu0 0.0
    %887 = vmatpush1.msra.mxu0 0.0
    %888 = vmatprep.subr.mxu0 0.0
    %889 = vmatpush1.msra.mxu0 0.0
    %890 = vmatprep.subr.mxu0 0.0
    %891 = vmatpush1.msra.mxu0 0.0
    %892 = vmatprep.subr.mxu0 0.0
    %893 = vmatpush1.msra.mxu0 0.0
    %894 = vmatprep.subr.mxu0 0.0
    %895 = vmatpush1.msra.mxu0 0.0
    %896 = vmatprep.subr.mxu0 0.0
    %897 = vmatpush1.msra.mxu0 0.0
    %898 = vmatprep.subr.mxu0 0.0
    %899 = vmatpush1.msra.mxu0 0.0
    %900 = vmatprep.subr.mxu0 0.0
    %901 = vmatpush1.msra.mxu0 0.0
    %902 = vmatprep.subr.mxu0 0.0
    %903 = vmatpush1.msra.mxu0 0.0
    %904 = vmatprep.subr.mxu0 0.0
    %905 = vmatpush1.msra.mxu0 0.0
    %906 = vmatprep.subr.mxu0 0.0
    %907 = vmatpush1.msra.mxu0 0.0
    %908 = vmatprep.subr.mxu0 0.0
    %909 = vmatpush1.msra.mxu0 0.0
    %910 = vmatprep.subr.mxu0 0.0
    %911 = vmatpush1.msra.mxu0 0.0
    %912 = vmatprep.subr.mxu0 0.0
    %913 = vmatpush1.msra.mxu0 0.0
    %914 = vmatprep.subr.mxu0 0.0
    %915 = vmatpush1.msra.mxu0 0.0
    %916 = vmatprep.subr.mxu0 0.0
    %917 = vmatpush1.msra.mxu0 0.0
    %918 = vmatprep.subr.mxu0 0.0
    %919 = vmatpush1.msra.mxu0 0.0
    %920 = vmatprep.subr.mxu0 0.0
    %921 = vmatpush1.msra.mxu0 0.0
    %922 = vmatprep.subr.mxu0 0.0
    %923 = vmatpush1.msra.mxu0 0.0
    %924 = vmatprep.subr.mxu0 0.0
    %925 = vmatpush1.msra.mxu0 0.0
    %926 = vmatprep.mubr.f32.mxu0 0.0
    %927 = vmatmul.mubr.f32.gmra.mrb[0].mxu0 %v860
    %v928 = vpop.f32.mrb[0].mxu0
    %v929 = vadd.f32 %v440, %v928
    %v930 = vpop.f32.mrb[0].mxu0
    %v931 = vadd.f32 %v444, %v930
    %932 = vdwg.mxu0
    %v933 = vadd.f32 %v401, %v929
    %v934 = vxor.u32 %v933, 2147483648
    %v935 = vmul.f32 %v934, 1.442695
    %v936 = vpow.pop %v935
    %v937 = vadd.f32 %v936, 1.0
    %v938 = vrcp.pop %v937
    %v939 = vmul.f32 1.0, %v938
    %v940 = vmul.f32 %v939, %v931
    %v941 = vrot.slane %v401, 2
    %v943 = vadd.f32 %v941, %v940
    %v944 = vtanh.pop %v943
    %v945 = vsub.f32 1.0, %v939
    %947 = vrot.lane.b32.xlu0 %v944, 64
    %v948 = vpop.permute.xlu0 %947
    %v950 = vmul.f32 %v945, %v948
    %v951 = vmul.f32 %v939, %v849
    %v952 = vadd.f32 %v950, %v951
    %v955 = vunpack.c.l.s4 1983009808
    %v956 = vunpack.c.0.s8 %v955
    %v957 = vlaneseq
    %v958 = vshrl.u32 %v957, 7
    %v959 = vsub.s32 %v956, %v958
    %v960 = vrot.slane %v952, %v959
    %961 = vrot.lane.b32.xlu0 %v960, 64
    %v962 = vpop.permute.xlu0 %961
    %v963 = vsel %vm143, %v962, 0
    %965 = vmatprep.subr.mxu0 %v420
    %966 = vmatpush1.msra.mxu0 %v419
    %967 = vmatprep.subr.mxu0 %v422
    %968 = vmatpush1.msra.mxu0 %v421
    %969 = vmatprep.subr.mxu0 %v424
    %970 = vmatpush1.msra.mxu0 %v423
    %971 = vmatprep.subr.mxu0 %v426
    %972 = vmatpush1.msra.mxu0 %v425
    %973 = vmatprep.subr.mxu0 %v428
    %974 = vmatpush1.msra.mxu0 %v427
    %975 = vmatprep.subr.mxu0 %v430
    %976 = vmatpush1.msra.mxu0 %v429
    %977 = vmatprep.subr.mxu0 %v432
    %978 = vmatpush1.msra.mxu0 %v431
    %979 = vmatprep.subr.mxu0 %v434
    %980 = vmatpush1.msra.mxu0 %v433
    %981 = vmatprep.subr.mxu0 0.0
    %982 = vmatpush1.msra.mxu0 0.0
    %983 = vmatprep.subr.mxu0 0.0
    %984 = vmatpush1.msra.mxu0 0.0
    %985 = vmatprep.subr.mxu0 0.0
    %986 = vmatpush1.msra.mxu0 0.0
    %987 = vmatprep.subr.mxu0 0.0
    %988 = vmatpush1.msra.mxu0 0.0
    %989 = vmatprep.subr.mxu0 0.0
    %990 = vmatpush1.msra.mxu0 0.0
    %991 = vmatprep.subr.mxu0 0.0
    %992 = vmatpush1.msra.mxu0 0.0
    %993 = vmatprep.subr.mxu0 0.0
    %994 = vmatpush1.msra.mxu0 0.0
    %995 = vmatprep.subr.mxu0 0.0
    %996 = vmatpush1.msra.mxu0 0.0
    %997 = vmatprep.subr.mxu0 0.0
    %998 = vmatpush1.msra.mxu0 0.0
    %999 = vmatprep.subr.mxu0 0.0
    %1000 = vmatpush1.msra.mxu0 0.0
    %1001 = vmatprep.subr.mxu0 0.0
    %1002 = vmatpush1.msra.mxu0 0.0
    %1003 = vmatprep.subr.mxu0 0.0
    %1004 = vmatpush1.msra.mxu0 0.0
    %1005 = vmatprep.subr.mxu0 0.0
    %1006 = vmatpush1.msra.mxu0 0.0
    %1007 = vmatprep.subr.mxu0 0.0
    %1008 = vmatpush1.msra.mxu0 0.0
    %1009 = vmatprep.subr.mxu0 0.0
    %1010 = vmatpush1.msra.mxu0 0.0
    %1011 = vmatprep.subr.mxu0 0.0
    %1012 = vmatpush1.msra.mxu0 0.0
    %1013 = vmatprep.subr.mxu0 0.0
    %1014 = vmatpush1.msra.mxu0 0.0
    %1015 = vmatprep.subr.mxu0 0.0
    %1016 = vmatpush1.msra.mxu0 0.0
    %1017 = vmatprep.subr.mxu0 0.0
    %1018 = vmatpush1.msra.mxu0 0.0
    %1019 = vmatprep.subr.mxu0 0.0
    %1020 = vmatpush1.msra.mxu0 0.0
    %1021 = vmatprep.subr.mxu0 0.0
    %1022 = vmatpush1.msra.mxu0 0.0
    %1023 = vmatprep.subr.mxu0 0.0
    %1024 = vmatpush1.msra.mxu0 0.0
    %1025 = vmatprep.subr.mxu0 0.0
    %1026 = vmatpush1.msra.mxu0 0.0
    %1027 = vmatprep.subr.mxu0 0.0
    %1028 = vmatpush1.msra.mxu0 0.0
    %1029 = vmatprep.mubr.f32.mxu0 0.0
    %1030 = vmatmul.mubr.f32.gmra.mrb[0].mxu0 %v963
    %v1031 = vpop.f32.mrb[0].mxu0
    %v1032 = vadd.f32 %v440, %v1031
    %v1033 = vpop.f32.mrb[0].mxu0
    %v1034 = vadd.f32 %v444, %v1033
    %1035 = vdwg.mxu0
    %v1036 = vadd.f32 %v409, %v1032
    %v1037 = vxor.u32 %v1036, 2147483648
    %v1038 = vmul.f32 %v1037, 1.442695
    %v1039 = vpow.pop %v1038
    %v1040 = vadd.f32 %v1039, 1.0
    %v1041 = vrcp.pop %v1040
    %v1042 = vmul.f32 1.0, %v1041
    %v1043 = vmul.f32 %v1042, %v1034
    %v1044 = vrot.slane %v409, 2
    %v1046 = vadd.f32 %v1044, %v1043
    %v1047 = vtanh.pop %v1046
    %v1048 = vsub.f32 1.0, %v1042
    %1050 = vrot.lane.b32.xlu0 %v1047, 64
    %v1051 = vpop.permute.xlu0 %1050
    %v1053 = vmul.f32 %v1048, %v1051
    %v1054 = vmul.f32 %v1042, %v952
    %v1055 = vadd.f32 %v1053, %v1054
    %v1058 = vunpack.c.l.s4 1983009808
    %v1059 = vunpack.c.0.s8 %v1058
    %v1060 = vlaneseq
    %v1061 = vshrl.u32 %v1060, 7
    %v1062 = vsub.s32 %v1059, %v1061
    %v1063 = vrot.slane %v1055, %v1062
    %1064 = vrot.lane.b32.xlu0 %v1063, 64
    %v1065 = vpop.permute.xlu0 %1064
    %v1066 = vsel %vm143, %v1065, 0
    %1068 = vmatprep.subr.mxu0 %v420
    %1069 = vmatpush1.msra.mxu0 %v419
    %1070 = vmatprep.subr.mxu0 %v422
    %1071 = vmatpush1.msra.mxu0 %v421
    %1072 = vmatprep.subr.mxu0 %v424
    %1073 = vmatpush1.msra.mxu0 %v423
    %1074 = vmatprep.subr.mxu0 %v426
    %1075 = vmatpush1.msra.mxu0 %v425
    %1076 = vmatprep.subr.mxu0 %v428
    %1077 = vmatpush1.msra.mxu0 %v427
    %1078 = vmatprep.subr.mxu0 %v430
    %1079 = vmatpush1.msra.mxu0 %v429
    %1080 = vmatprep.subr.mxu0 %v432
    %1081 = vmatpush1.msra.mxu0 %v431
    %1082 = vmatprep.subr.mxu0 %v434
    %1083 = vmatpush1.msra.mxu0 %v433
    %1084 = vmatprep.subr.mxu0 0.0
    %1085 = vmatpush1.msra.mxu0 0.0
    %1086 = vmatprep.subr.mxu0 0.0
    %1087 = vmatpush1.msra.mxu0 0.0
    %1088 = vmatprep.subr.mxu0 0.0
    %1089 = vmatpush1.msra.mxu0 0.0
    %1090 = vmatprep.subr.mxu0 0.0
    %1091 = vmatpush1.msra.mxu0 0.0
    %1092 = vmatprep.subr.mxu0 0.0
    %1093 = vmatpush1.msra.mxu0 0.0
    %1094 = vmatprep.subr.mxu0 0.0
    %1095 = vmatpush1.msra.mxu0 0.0
    %1096 = vmatprep.subr.mxu0 0.0
    %1097 = vmatpush1.msra.mxu0 0.0
    %1098 = vmatprep.subr.mxu0 0.0
    %1099 = vmatpush1.msra.mxu0 0.0
    %1100 = vmatprep.subr.mxu0 0.0
    %1101 = vmatpush1.msra.mxu0 0.0
    %1102 = vmatprep.subr.mxu0 0.0
    %1103 = vmatpush1.msra.mxu0 0.0
    %1104 = vmatprep.subr.mxu0 0.0
    %1105 = vmatpush1.msra.mxu0 0.0
    %1106 = vmatprep.subr.mxu0 0.0
    %1107 = vmatpush1.msra.mxu0 0.0
    %1108 = vmatprep.subr.mxu0 0.0
    %1109 = vmatpush1.msra.mxu0 0.0
    %1110 = vmatprep.subr.mxu0 0.0
    %1111 = vmatpush1.msra.mxu0 0.0
    %1112 = vmatprep.subr.mxu0 0.0
    %1113 = vmatpush1.msra.mxu0 0.0
    %1114 = vmatprep.subr.mxu0 0.0
    %1115 = vmatpush1.msra.mxu0 0.0
    %1116 = vmatprep.subr.mxu0 0.0
    %1117 = vmatpush1.msra.mxu0 0.0
    %1118 = vmatprep.subr.mxu0 0.0
    %1119 = vmatpush1.msra.mxu0 0.0
    %1120 = vmatprep.subr.mxu0 0.0
    %1121 = vmatpush1.msra.mxu0 0.0
    %1122 = vmatprep.subr.mxu0 0.0
    %1123 = vmatpush1.msra.mxu0 0.0
    %1124 = vmatprep.subr.mxu0 0.0
    %1125 = vmatpush1.msra.mxu0 0.0
    %1126 = vmatprep.subr.mxu0 0.0
    %1127 = vmatpush1.msra.mxu0 0.0
    %1128 = vmatprep.subr.mxu0 0.0
    %1129 = vmatpush1.msra.mxu0 0.0
    %1130 = vmatprep.subr.mxu0 0.0
    %1131 = vmatpush1.msra.mxu0 0.0
    %1132 = vmatprep.mubr.f32.mxu0 0.0
    %1133 = vmatmul.mubr.f32.gmra.mrb[0].mxu0 %v1066
    %v1134 = vpop.f32.mrb[0].mxu0
    %v1135 = vadd.f32 %v440, %v1134
    %v1136 = vpop.f32.mrb[0].mxu0
    %v1137 = vadd.f32 %v444, %v1136
    %1138 = vdwg.mxu0
    %v1139 = vadd.f32 %v408, %v1135
    %v1140 = vxor.u32 %v1139, 2147483648
    %v1141 = vmul.f32 %v1140, 1.442695
    %v1142 = vpow.pop %v1141
    %v1143 = vadd.f32 %v1142, 1.0
    %v1144 = vrcp.pop %v1143
    %v1145 = vmul.f32 1.0, %v1144
    %v1146 = vmul.f32 %v1145, %v1137
    %v1147 = vrot.slane %v408, 2
    %v1149 = vadd.f32 %v1147, %v1146
    %v1150 = vtanh.pop %v1149
    %v1151 = vsub.f32 1.0, %v1145
    %1153 = vrot.lane.b32.xlu0 %v1150, 64
    %v1154 = vpop.permute.xlu0 %1153
    %v1156 = vmul.f32 %v1151, %v1154
    %v1157 = vmul.f32 %v1145, %v1055
    %v1158 = vadd.f32 %v1156, %v1157
    %v1161 = vunpack.c.l.s4 1983009808
    %v1162 = vunpack.c.0.s8 %v1161
    %v1163 = vlaneseq
    %v1164 = vshrl.u32 %v1163, 7
    %v1165 = vsub.s32 %v1162, %v1164
    %v1166 = vrot.slane %v1158, %v1165
    %1167 = vrot.lane.b32.xlu0 %v1166, 64
    %v1168 = vpop.permute.xlu0 %1167
    %v1169 = vsel %vm143, %v1168, 0
    %1171 = vmatprep.subr.mxu0 %v420
    %1172 = vmatpush1.msra.mxu0 %v419
    %1173 = vmatprep.subr.mxu0 %v422
    %1174 = vmatpush1.msra.mxu0 %v421
    %1175 = vmatprep.subr.mxu0 %v424
    %1176 = vmatpush1.msra.mxu0 %v423
    %1177 = vmatprep.subr.mxu0 %v426
    %1178 = vmatpush1.msra.mxu0 %v425
    %1179 = vmatprep.subr.mxu0 %v428
    %1180 = vmatpush1.msra.mxu0 %v427
    %1181 = vmatprep.subr.mxu0 %v430
    %1182 = vmatpush1.msra.mxu0 %v429
    %1183 = vmatprep.subr.mxu0 %v432
    %1184 = vmatpush1.msra.mxu0 %v431
    %1185 = vmatprep.subr.mxu0 %v434
    %1186 = vmatpush1.msra.mxu0 %v433
    %1187 = vmatprep.subr.mxu0 0.0
    %1188 = vmatpush1.msra.mxu0 0.0
    %1189 = vmatprep.subr.mxu0 0.0
    %1190 = vmatpush1.msra.mxu0 0.0
    %1191 = vmatprep.subr.mxu0 0.0
    %1192 = vmatpush1.msra.mxu0 0.0
    %1193 = vmatprep.subr.mxu0 0.0
    %1194 = vmatpush1.msra.mxu0 0.0
    %1195 = vmatprep.subr.mxu0 0.0
    %1196 = vmatpush1.msra.mxu0 0.0
    %1197 = vmatprep.subr.mxu0 0.0
    %1198 = vmatpush1.msra.mxu0 0.0
    %1199 = vmatprep.subr.mxu0 0.0
    %1200 = vmatpush1.msra.mxu0 0.0
    %1201 = vmatprep.subr.mxu0 0.0
    %1202 = vmatpush1.msra.mxu0 0.0
    %1203 = vmatprep.subr.mxu0 0.0
    %1204 = vmatpush1.msra.mxu0 0.0
    %1205 = vmatprep.subr.mxu0 0.0
    %1206 = vmatpush1.msra.mxu0 0.0
    %1207 = vmatprep.subr.mxu0 0.0
    %1208 = vmatpush1.msra.mxu0 0.0
    %1209 = vmatprep.subr.mxu0 0.0
    %1210 = vmatpush1.msra.mxu0 0.0
    %1211 = vmatprep.subr.mxu0 0.0
    %1212 = vmatpush1.msra.mxu0 0.0
    %1213 = vmatprep.subr.mxu0 0.0
    %1214 = vmatpush1.msra.mxu0 0.0
    %1215 = vmatprep.subr.mxu0 0.0
    %1216 = vmatpush1.msra.mxu0 0.0
    %1217 = vmatprep.subr.mxu0 0.0
    %1218 = vmatpush1.msra.mxu0 0.0
    %1219 = vmatprep.subr.mxu0 0.0
    %1220 = vmatpush1.msra.mxu0 0.0
    %1221 = vmatprep.subr.mxu0 0.0
    %1222 = vmatpush1.msra.mxu0 0.0
    %1223 = vmatprep.subr.mxu0 0.0
    %1224 = vmatpush1.msra.mxu0 0.0
    %1225 = vmatprep.subr.mxu0 0.0
    %1226 = vmatpush1.msra.mxu0 0.0
    %1227 = vmatprep.subr.mxu0 0.0
    %1228 = vmatpush1.msra.mxu0 0.0
    %1229 = vmatprep.subr.mxu0 0.0
    %1230 = vmatpush1.msra.mxu0 0.0
    %1231 = vmatprep.subr.mxu0 0.0
    %1232 = vmatpush1.msra.mxu0 0.0
    %1233 = vmatprep.subr.mxu0 0.0
    %1234 = vmatpush1.msra.mxu0 0.0
    %1235 = vmatprep.mubr.f32.mxu0 0.0
    %1236 = vmatmul.mubr.f32.gmra.mrb[0].mxu0 %v1169
    %v1237 = vpop.f32.mrb[0].mxu0
    %v1238 = vadd.f32 %v440, %v1237
    %v1239 = vpop.f32.mrb[0].mxu0
    %v1240 = vadd.f32 %v444, %v1239
    %1241 = vdwg.mxu0
    %v1242 = vadd.f32 %v410, %v1238
    %v1243 = vxor.u32 %v1242, 2147483648
    %v1244 = vmul.f32 %v1243, 1.442695
    %v1245 = vpow.pop %v1244
    %v1246 = vadd.f32 %v1245, 1.0
    %v1247 = vrcp.pop %v1246
    %v1248 = vmul.f32 1.0, %v1247
    %v1249 = vmul.f32 %v1248, %v1240
    %v1250 = vrot.slane %v410, 2
    %v1252 = vadd.f32 %v1250, %v1249
    %v1253 = vtanh.pop %v1252
    %v1254 = vsub.f32 1.0, %v1248
    %1256 = vrot.lane.b32.xlu0 %v1253, 64
    %v1257 = vpop.permute.xlu0 %1256
    %v1259 = vmul.f32 %v1254, %v1257
    %v1260 = vmul.f32 %v1248, %v1158
    %v1261 = vadd.f32 %v1259, %v1260
    %1263 = vset.pattern.permute.xlu0 0
    %1264 = vperm.xlu0 %1263, %v117
    %v1265 = vpop.permute.xlu0 %1264
    %1268 = vset.pattern.permute.xlu0 0
    %1269 = vperm.xlu0 %1268, %v118
    %v1270 = vpop.permute.xlu0 %1269
    %1273 = vset.pattern.permute.xlu0 0
    %1274 = vperm.xlu0 %1273, %v119
    %v1275 = vpop.permute.xlu0 %1274
    %1278 = vset.pattern.permute.xlu0 0
    %1279 = vperm.xlu0 %1278, %v120
    %v1280 = vpop.permute.xlu0 %1279
    %1283 = vset.pattern.permute.xlu0 0
    %1284 = vperm.xlu0 %1283, %v121
    %v1285 = vpop.permute.xlu0 %1284
    %1288 = vset.pattern.permute.xlu0 0
    %1289 = vperm.xlu0 %1288, %v122
    %v1290 = vpop.permute.xlu0 %1289
    %1293 = vset.pattern.permute.xlu0 0
    %1294 = vperm.xlu0 %1293, %v123
    %v1295 = vpop.permute.xlu0 %1294
    %1298 = vset.pattern.permute.xlu0 0
    %1299 = vperm.xlu0 %1298, %v124
    %v1300 = vpop.permute.xlu0 %1299
    %v1302 = vmul.f32 %v540, %v1265
    %v1303 = vmul.f32 %v643, %v1270
    %v1304 = vmul.f32 %v746, %v1275
    %v1305 = vmul.f32 %v849, %v1280
    %v1306 = vmul.f32 %v952, %v1285
    %v1307 = vmul.f32 %v1055, %v1290
    %v1308 = vmul.f32 %v1158, %v1295
    %v1309 = vmul.f32 %v1261, %v1300
    %v1310 = vld [vmem:[#allocation9] sm:$0x1]
    %v1312 = vlaneseq
    %v1313 = vshrl.u32 %v1312, 7
    %v1314 = vsub.s32 0, %v1313
    %v1315 = vrot.slane %v1310, %v1314
    %v1317 = vunpack.c.l.s4 1983009808
    %v1318 = vunpack.c.0.s8 %v1317
    %v1319 = vlaneseq
    %v1320 = vshrl.u32 %v1319, 7
    %v1321 = vsub.s32 %v1318, %v1320
    %v1322 = vrot.slane %v1315, %v1321
    %1323 = vrot.lane.b32.xlu0 %v1322, 64
    %v1324 = vpop.permute.xlu0 %1323
    %v1326 = vmul.f32 %v1302, %v1324
    %v1327 = vmul.f32 %v1303, %v1324
    %v1328 = vmul.f32 %v1304, %v1324
    %v1329 = vmul.f32 %v1305, %v1324
    %v1330 = vmul.f32 %v1306, %v1324
    %v1331 = vmul.f32 %v1307, %v1324
    %v1332 = vmul.f32 %v1308, %v1324
    %v1333 = vmul.f32 %v1309, %v1324
    %v1343 = vunpack.c.l.s4 1983009808
    %v1344 = vunpack.c.0.s8 %v1343
    %v1345 = vlaneseq
    %v1346 = vshrl.u32 %v1345, 7
    %v1347 = vsub.s32 %v1344, %v1346
    %v1348 = vrot.slane %v1326, %v1347
    %v1350 = vunpack.c.l.s4 1983009808
    %v1351 = vunpack.c.0.s8 %v1350
    %v1352 = vlaneseq
    %v1353 = vshrl.u32 %v1352, 7
    %v1354 = vsub.s32 %v1351, %v1353
    %v1355 = vrot.slane %v1327, %v1354
    %v1357 = vunpack.c.l.s4 1983009808
    %v1358 = vunpack.c.0.s8 %v1357
    %v1359 = vlaneseq
    %v1360 = vshrl.u32 %v1359, 7
    %v1361 = vsub.s32 %v1358, %v1360
    %v1362 = vrot.slane %v1328, %v1361
    %v1364 = vunpack.c.l.s4 1983009808
    %v1365 = vunpack.c.0.s8 %v1364
    %v1366 = vlaneseq
    %v1367 = vshrl.u32 %v1366, 7
    %v1368 = vsub.s32 %v1365, %v1367
    %v1369 = vrot.slane %v1329, %v1368
    %v1371 = vunpack.c.l.s4 1983009808
    %v1372 = vunpack.c.0.s8 %v1371
    %v1373 = vlaneseq
    %v1374 = vshrl.u32 %v1373, 7
    %v1375 = vsub.s32 %v1372, %v1374
    %v1376 = vrot.slane %v1330, %v1375
    %v1378 = vunpack.c.l.s4 1983009808
    %v1379 = vunpack.c.0.s8 %v1378
    %v1380 = vlaneseq
    %v1381 = vshrl.u32 %v1380, 7
    %v1382 = vsub.s32 %v1379, %v1381
    %v1383 = vrot.slane %v1331, %v1382
    %v1385 = vunpack.c.l.s4 1983009808
    %v1386 = vunpack.c.0.s8 %v1385
    %v1387 = vlaneseq
    %v1388 = vshrl.u32 %v1387, 7
    %v1389 = vsub.s32 %v1386, %v1388
    %v1390 = vrot.slane %v1332, %v1389
    %v1392 = vunpack.c.l.s4 1983009808
    %v1393 = vunpack.c.0.s8 %v1392
    %v1394 = vlaneseq
    %v1395 = vshrl.u32 %v1394, 7
    %v1396 = vsub.s32 %v1393, %v1395
    %v1397 = vrot.slane %v1333, %v1396
    %1398 = vrot.lane.b32.xlu0 %v1348, 64
    %v1399 = vpop.permute.xlu0 %1398
    %1400 = vrot.lane.b32.xlu0 %v1355, 64
    %v1401 = vpop.permute.xlu0 %1400
    %1402 = vrot.lane.b32.xlu0 %v1362, 64
    %v1403 = vpop.permute.xlu0 %1402
    %1404 = vrot.lane.b32.xlu0 %v1369, 64
    %v1405 = vpop.permute.xlu0 %1404
    %1406 = vrot.lane.b32.xlu0 %v1376, 64
    %v1407 = vpop.permute.xlu0 %1406
    %1408 = vrot.lane.b32.xlu0 %v1383, 64
    %v1409 = vpop.permute.xlu0 %1408
    %1410 = vrot.lane.b32.xlu0 %v1390, 64
    %v1411 = vpop.permute.xlu0 %1410
    %1412 = vrot.lane.b32.xlu0 %v1397, 64
    %v1413 = vpop.permute.xlu0 %1412
    %vm1422 = vcmask 254976
    %v1423 = vsel %vm1422, %v1399, 0.0
    %1424 = vadd.xlane.f32.xlu0 %v1423
    %v1425 = vpop.xlane.xlu0 %1424
    %v1426 = vsel %vm1422, %v1401, 0.0
    %1427 = vadd.xlane.f32.xlu0 %v1426
    %v1428 = vpop.xlane.xlu0 %1427
    %v1429 = vsel %vm1422, %v1403, 0.0
    %1430 = vadd.xlane.f32.xlu0 %v1429
    %v1431 = vpop.xlane.xlu0 %1430
    %v1432 = vsel %vm1422, %v1405, 0.0
    %1433 = vadd.xlane.f32.xlu0 %v1432
    %v1434 = vpop.xlane.xlu0 %1433
    %v1435 = vsel %vm1422, %v1407, 0.0
    %1436 = vadd.xlane.f32.xlu0 %v1435
    %v1437 = vpop.xlane.xlu0 %1436
    %v1438 = vsel %vm1422, %v1409, 0.0
    %1439 = vadd.xlane.f32.xlu0 %v1438
    %v1440 = vpop.xlane.xlu0 %1439
    %v1441 = vsel %vm1422, %v1411, 0.0
    %1442 = vadd.xlane.f32.xlu0 %v1441
    %v1443 = vpop.xlane.xlu0 %1442
    %v1444 = vsel %vm1422, %v1413, 0.0
    %1445 = vadd.xlane.f32.xlu0 %v1444
    %v1446 = vpop.xlane.xlu0 %1445
    %v1447 = vld [vmem:[#allocation2] sm:$0x1]
    %v1449 = vlaneseq
    %v1450 = vshrl.u32 %v1449, 7
    %v1451 = vsub.s32 0, %v1450
    %v1452 = vrot.slane %v1447, %v1451
    %v1454 = vadd.f32 %v1425, %v1452
    %v1455 = vadd.f32 %v1428, %v1452
    %v1456 = vadd.f32 %v1431, %v1452
    %v1457 = vadd.f32 %v1434, %v1452
    %v1458 = vadd.f32 %v1437, %v1452
    %v1459 = vadd.f32 %v1440, %v1452
    %v1460 = vadd.f32 %v1443, %v1452
    %v1461 = vadd.f32 %v1446, %v1452
    %v1462 = vadd.f32 %v1454, %v125
    %v1463 = vadd.f32 %v1455, %v126
    %v1464 = vadd.f32 %v1456, %v127
    %v1465 = vadd.f32 %v1457, %v128
    %v1466 = vadd.f32 %v1458, %v129
    %v1467 = vadd.f32 %v1459, %v130
    %v1468 = vadd.f32 %v1460, %v131
    %v1469 = vadd.f32 %v1461, %v132
    %v1470 = vld [vmem:[%s11] sm:$0xff]
    %v1471 = vld [vmem:[%s11 + $0x8] sm:$0xff]
    %v1472 = vld [vmem:[%s11 + $0x10] sm:$0xff]
    %v1473 = vld [vmem:[%s11 + $0x18] sm:$0xff]
    %v1474 = vld [vmem:[#allocation11] sm:$0x1]
    %v1476 = vlaneseq
    %v1477 = vshrl.u32 %v1476, 7
    %v1478 = vsub.s32 0, %v1477
    %v1479 = vrot.slane %v1474, %v1478
    %v1489 = vcombine.low %v1302, %v1303
    %v1490 = vcombine.low %v1304, %v1305
    %v1492 = vunpack.c.l.s4 1983009808
    %v1493 = vunpack.c.0.s8 %v1492
    %v1494 = vlaneseq
    %v1495 = vshrl.u32 %v1494, 7
    %v1496 = vsub.s32 %v1493, %v1495
    %v1497 = vrot.slane %v1489, %v1496
    %v1499 = vunpack.c.l.s4 1983009808
    %v1500 = vunpack.c.0.s8 %v1499
    %v1501 = vlaneseq
    %v1502 = vshrl.u32 %v1501, 7
    %v1503 = vsub.s32 %v1500, %v1502
    %v1504 = vrot.slane %v1490, %v1503
    %v1505 = vcombine.low %v1497, %v1504
    %v1506 = vcombine.low %v1306, %v1307
    %v1507 = vcombine.low %v1308, %v1309
    %v1509 = vunpack.c.l.s4 1983009808
    %v1510 = vunpack.c.0.s8 %v1509
    %v1511 = vlaneseq
    %v1512 = vshrl.u32 %v1511, 7
    %v1513 = vsub.s32 %v1510, %v1512
    %v1514 = vrot.slane %v1506, %v1513
    %v1516 = vunpack.c.l.s4 1983009808
    %v1517 = vunpack.c.0.s8 %v1516
    %v1518 = vlaneseq
    %v1519 = vshrl.u32 %v1518, 7
    %v1520 = vsub.s32 %v1517, %v1519
    %v1521 = vrot.slane %v1507, %v1520
    %v1522 = vcombine.low %v1514, %v1521
    %1523 = vrot.lane.b32.xlu0 %v1505, 32
    %v1524 = vpop.permute.xlu0 %1523
    %1525 = vrot.lane.b32.xlu0 %v1522, 32
    %v1526 = vpop.permute.xlu0 %1525
    %v1527 = vsel %vm289, %v1524, 0
    %v1529 = vsel %vm289, %v1526, 0
    %1531 = vmatprep.subr.mxu0 0.0
    %1532 = vmatpush1.msra.mxu0 %v1470
    %1533 = vmatprep.subr.mxu0 0.0
    %1534 = vmatpush1.msra.mxu0 %v1471
    %1535 = vmatprep.subr.mxu0 0.0
    %1536 = vmatpush1.msra.mxu0 %v1472
    %1537 = vmatprep.subr.mxu0 0.0
    %1538 = vmatpush1.msra.mxu0 %v1473
    %1539 = vmatprep.subr.mxu0 0.0
    %1540 = vmatpush1.msra.mxu0 0.0
    %1541 = vmatprep.subr.mxu0 0.0
    %1542 = vmatpush1.msra.mxu0 0.0
    %1543 = vmatprep.subr.mxu0 0.0
    %1544 = vmatpush1.msra.mxu0 0.0
    %1545 = vmatprep.subr.mxu0 0.0
    %1546 = vmatpush1.msra.mxu0 0.0
    %1547 = vmatprep.subr.mxu0 0.0
    %1548 = vmatpush1.msra.mxu0 0.0
    %1549 = vmatprep.subr.mxu0 0.0
    %1550 = vmatpush1.msra.mxu0 0.0
    %1551 = vmatprep.subr.mxu0 0.0
    %1552 = vmatpush1.msra.mxu0 0.0
    %1553 = vmatprep.subr.mxu0 0.0
    %1554 = vmatpush1.msra.mxu0 0.0
    %1555 = vmatprep.subr.mxu0 0.0
    %1556 = vmatpush1.msra.mxu0 0.0
    %1557 = vmatprep.subr.mxu0 0.0
    %1558 = vmatpush1.msra.mxu0 0.0
    %1559 = vmatprep.subr.mxu0 0.0
    %1560 = vmatpush1.msra.mxu0 0.0
    %1561 = vmatprep.subr.mxu0 0.0
    %1562 = vmatpush1.msra.mxu0 0.0
    %1563 = vmatprep.subr.mxu0 0.0
    %1564 = vmatpush1.msra.mxu0 0.0
    %1565 = vmatprep.subr.mxu0 0.0
    %1566 = vmatpush1.msra.mxu0 0.0
    %1567 = vmatprep.subr.mxu0 0.0
    %1568 = vmatpush1.msra.mxu0 0.0
    %1569 = vmatprep.subr.mxu0 0.0
    %1570 = vmatpush1.msra.mxu0 0.0
    %1571 = vmatprep.subr.mxu0 0.0
    %1572 = vmatpush1.msra.mxu0 0.0
    %1573 = vmatprep.subr.mxu0 0.0
    %1574 = vmatpush1.msra.mxu0 0.0
    %1575 = vmatprep.subr.mxu0 0.0
    %1576 = vmatpush1.msra.mxu0 0.0
    %1577 = vmatprep.subr.mxu0 0.0
    %1578 = vmatpush1.msra.mxu0 0.0
    %1579 = vmatprep.subr.mxu0 0.0
    %1580 = vmatpush1.msra.mxu0 0.0
    %1581 = vmatprep.subr.mxu0 0.0
    %1582 = vmatpush1.msra.mxu0 0.0
    %1583 = vmatprep.subr.mxu0 0.0
    %1584 = vmatpush1.msra.mxu0 0.0
    %1585 = vmatprep.subr.mxu0 0.0
    %1586 = vmatpush1.msra.mxu0 0.0
    %1587 = vmatprep.subr.mxu0 0.0
    %1588 = vmatpush1.msra.mxu0 0.0
    %1589 = vmatprep.subr.mxu0 0.0
    %1590 = vmatpush1.msra.mxu0 0.0
    %1591 = vmatprep.subr.mxu0 0.0
    %1592 = vmatpush1.msra.mxu0 0.0
    %1593 = vmatprep.subr.mxu0 0.0
    %1594 = vmatpush1.msra.mxu0 0.0
    %1595 = vmatprep.mubr.f32.mxu0 0.0
    %1596 = vmatmul.mubr.f32.gmra.mrb[0].mxu0 %v1527
    %v1597 = vpop.f32.mrb[0].mxu0
    %v1598 = vadd.f32 %v1479, %v1597
    %v1599 = vpop.f32.mrb[0].mxu0
    %1600 = vmatprep.mubr.f32.mxu0 0.0
    %1601 = vmatmul.mubr.f32.gmra.mrb[0].mxu0 %v1529
    %v1602 = vpop.f32.mrb[0].mxu0
    %v1603 = vadd.f32 %v1479, %v1602
    %v1604 = vpop.f32.mrb[0].mxu0
    %1605 = vdwg.mxu0
    %v1606 = vtanh.pop %v1598
    %v1607 = vtanh.pop %v1603
    %v1610 = vcombine.high %v1606, %v1606
    %v1612 = vunpack.c.l.s4 1983009808
    %v1613 = vunpack.c.0.s8 %v1612
    %v1614 = vlaneseq
    %v1615 = vshrl.u32 %v1614, 7
    %v1616 = vsub.s32 %v1613, %v1615
    %v1617 = vrot.slane %v1606, %v1616
    %v1619 = vunpack.c.l.s4 1983009808
    %v1620 = vunpack.c.0.s8 %v1619
    %v1621 = vlaneseq
    %v1622 = vshrl.u32 %v1621, 7
    %v1623 = vsub.s32 %v1620, %v1622
    %v1624 = vrot.slane %v1610, %v1623
    %v1625 = vcombine.high %v1617, %v1617
    %v1626 = vcombine.high %v1624, %v1624
    %v1627 = vcombine.high %v1607, %v1607
    %v1629 = vunpack.c.l.s4 1983009808
    %v1630 = vunpack.c.0.s8 %v1629
    %v1631 = vlaneseq
    %v1632 = vshrl.u32 %v1631, 7
    %v1633 = vsub.s32 %v1630, %v1632
    %v1634 = vrot.slane %v1607, %v1633
    %v1636 = vunpack.c.l.s4 1983009808
    %v1637 = vunpack.c.0.s8 %v1636
    %v1638 = vlaneseq
    %v1639 = vshrl.u32 %v1638, 7
    %v1640 = vsub.s32 %v1637, %v1639
    %v1641 = vrot.slane %v1627, %v1640
    %v1642 = vcombine.high %v1634, %v1634
    %v1643 = vcombine.high %v1641, %v1641
    %v1652 = vmul.f32 %v1617, %v234
    %v1653 = vmul.f32 %v1625, %v242
    %v1654 = vmul.f32 %v1624, %v241
    %v1655 = vmul.f32 %v1626, %v243
    %v1656 = vmul.f32 %v1634, %v251
    %v1657 = vmul.f32 %v1642, %v259
    %v1658 = vmul.f32 %v1641, %v258
    %v1659 = vmul.f32 %v1643, %v260
    %v1660 = vmul.f32 %v1652, %v1265
    %v1661 = vmul.f32 %v1653, %v1270
    %v1662 = vmul.f32 %v1654, %v1275
    %v1663 = vmul.f32 %v1655, %v1280
    %v1664 = vmul.f32 %v1656, %v1285
    %v1665 = vmul.f32 %v1657, %v1290
    %v1666 = vmul.f32 %v1658, %v1295
    %v1667 = vmul.f32 %v1659, %v1300
    %v1668 = vmax.f32 %v1462, -1e+30
    %v1669 = vsub.f32 -1e+30, %v1668
    %v1670 = vmul.f32 %v1669, 1.442695
    %v1671 = vpow.pop %v1670
    %v1672 = vsub.f32 %v1462, %v1668
    %v1673 = vmul.f32 %v1672, 1.442695
    %v1674 = vpow.pop %v1673
    %v1675 = vmul.f32 %v1671, 0.0
    %v1676 = vadd.f32 %v1675, %v1674
    %1678 = vset.pattern.permute.xlu0 0
    %1679 = vperm.xlu0 %1678, %v1671
    %v1680 = vpop.permute.xlu0 %1679
    %v1682 = vmul.f32 %v1680, 0.0
    %1684 = vset.pattern.permute.xlu0 0
    %1685 = vperm.xlu0 %1684, %v1674
    %v1686 = vpop.permute.xlu0 %1685
    %v1688 = vmul.f32 %v1686, %v1660
    %v1689 = vadd.f32 %v1682, %v1688
    %1691 = vset.pattern.permute.xlu0 0
    %1692 = vperm.xlu0 %1691, %v1676
    %v1693 = vpop.permute.xlu0 %1692
    %v1695 = vrcp.pop %v1693
    %v1696 = vmul.f32 %v1689, %v1695
    %v1697 = vmax.f32 %v1668, %v1463
    %v1698 = vsub.f32 %v1668, %v1697
    %v1699 = vmul.f32 %v1698, 1.442695
    %v1700 = vpow.pop %v1699
    %v1701 = vsub.f32 %v1463, %v1697
    %v1702 = vmul.f32 %v1701, 1.442695
    %v1703 = vpow.pop %v1702
    %v1704 = vmul.f32 %v1676, %v1700
    %v1705 = vadd.f32 %v1704, %v1703
    %1707 = vset.pattern.permute.xlu0 0
    %1708 = vperm.xlu0 %1707, %v1700
    %v1709 = vpop.permute.xlu0 %1708
    %v1711 = vmul.f32 %v1689, %v1709
    %1713 = vset.pattern.permute.xlu0 0
    %1714 = vperm.xlu0 %1713, %v1703
    %v1715 = vpop.permute.xlu0 %1714
    %v1717 = vmul.f32 %v1715, %v1661
    %v1718 = vadd.f32 %v1711, %v1717
    %1720 = vset.pattern.permute.xlu0 0
    %1721 = vperm.xlu0 %1720, %v1705
    %v1722 = vpop.permute.xlu0 %1721
    %v1724 = vrcp.pop %v1722
    %v1725 = vmul.f32 %v1718, %v1724
    %v1726 = vmax.f32 %v1697, %v1464
    %v1727 = vsub.f32 %v1697, %v1726
    %v1728 = vmul.f32 %v1727, 1.442695
    %v1729 = vpow.pop %v1728
    %v1730 = vsub.f32 %v1464, %v1726
    %v1731 = vmul.f32 %v1730, 1.442695
    %v1732 = vpow.pop %v1731
    %v1733 = vmul.f32 %v1705, %v1729
    %v1734 = vadd.f32 %v1733, %v1732
    %1736 = vset.pattern.permute.xlu0 0
    %1737 = vperm.xlu0 %1736, %v1729
    %v1738 = vpop.permute.xlu0 %1737
    %v1740 = vmul.f32 %v1718, %v1738
    %1742 = vset.pattern.permute.xlu0 0
    %1743 = vperm.xlu0 %1742, %v1732
    %v1744 = vpop.permute.xlu0 %1743
    %v1746 = vmul.f32 %v1744, %v1662
    %v1747 = vadd.f32 %v1740, %v1746
    %1749 = vset.pattern.permute.xlu0 0
    %1750 = vperm.xlu0 %1749, %v1734
    %v1751 = vpop.permute.xlu0 %1750
    %v1753 = vrcp.pop %v1751
    %v1754 = vmul.f32 %v1747, %v1753
    %v1755 = vmax.f32 %v1726, %v1465
    %v1756 = vsub.f32 %v1726, %v1755
    %v1757 = vmul.f32 %v1756, 1.442695
    %v1758 = vpow.pop %v1757
    %v1759 = vsub.f32 %v1465, %v1755
    %v1760 = vmul.f32 %v1759, 1.442695
    %v1761 = vpow.pop %v1760
    %v1762 = vmul.f32 %v1734, %v1758
    %v1763 = vadd.f32 %v1762, %v1761
    %1765 = vset.pattern.permute.xlu0 0
    %1766 = vperm.xlu0 %1765, %v1758
    %v1767 = vpop.permute.xlu0 %1766
    %v1769 = vmul.f32 %v1747, %v1767
    %1771 = vset.pattern.permute.xlu0 0
    %1772 = vperm.xlu0 %1771, %v1761
    %v1773 = vpop.permute.xlu0 %1772
    %v1775 = vmul.f32 %v1773, %v1663
    %v1776 = vadd.f32 %v1769, %v1775
    %1778 = vset.pattern.permute.xlu0 0
    %1779 = vperm.xlu0 %1778, %v1763
    %v1780 = vpop.permute.xlu0 %1779
    %v1782 = vrcp.pop %v1780
    %v1783 = vmul.f32 %v1776, %v1782
    %v1784 = vmax.f32 %v1755, %v1466
    %v1785 = vsub.f32 %v1755, %v1784
    %v1786 = vmul.f32 %v1785, 1.442695
    %v1787 = vpow.pop %v1786
    %v1788 = vsub.f32 %v1466, %v1784
    %v1789 = vmul.f32 %v1788, 1.442695
    %v1790 = vpow.pop %v1789
    %v1791 = vmul.f32 %v1763, %v1787
    %v1792 = vadd.f32 %v1791, %v1790
    %1794 = vset.pattern.permute.xlu0 0
    %1795 = vperm.xlu0 %1794, %v1787
    %v1796 = vpop.permute.xlu0 %1795
    %v1798 = vmul.f32 %v1776, %v1796
    %1800 = vset.pattern.permute.xlu0 0
    %1801 = vperm.xlu0 %1800, %v1790
    %v1802 = vpop.permute.xlu0 %1801
    %v1804 = vmul.f32 %v1802, %v1664
    %v1805 = vadd.f32 %v1798, %v1804
    %1807 = vset.pattern.permute.xlu0 0
    %1808 = vperm.xlu0 %1807, %v1792
    %v1809 = vpop.permute.xlu0 %1808
    %v1811 = vrcp.pop %v1809
    %v1812 = vmul.f32 %v1805, %v1811
    %v1813 = vmax.f32 %v1784, %v1467
    %v1814 = vsub.f32 %v1784, %v1813
    %v1815 = vmul.f32 %v1814, 1.442695
    %v1816 = vpow.pop %v1815
    %v1817 = vsub.f32 %v1467, %v1813
    %v1818 = vmul.f32 %v1817, 1.442695
    %v1819 = vpow.pop %v1818
    %v1820 = vmul.f32 %v1792, %v1816
    %v1821 = vadd.f32 %v1820, %v1819
    %1823 = vset.pattern.permute.xlu0 0
    %1824 = vperm.xlu0 %1823, %v1816
    %v1825 = vpop.permute.xlu0 %1824
    %v1827 = vmul.f32 %v1805, %v1825
    %1829 = vset.pattern.permute.xlu0 0
    %1830 = vperm.xlu0 %1829, %v1819
    %v1831 = vpop.permute.xlu0 %1830
    %v1833 = vmul.f32 %v1831, %v1665
    %v1834 = vadd.f32 %v1827, %v1833
    %1836 = vset.pattern.permute.xlu0 0
    %1837 = vperm.xlu0 %1836, %v1821
    %v1838 = vpop.permute.xlu0 %1837
    %v1840 = vrcp.pop %v1838
    %v1841 = vmul.f32 %v1834, %v1840
    %v1842 = vmax.f32 %v1813, %v1468
    %v1843 = vsub.f32 %v1813, %v1842
    %v1844 = vmul.f32 %v1843, 1.442695
    %v1845 = vpow.pop %v1844
    %v1846 = vsub.f32 %v1468, %v1842
    %v1847 = vmul.f32 %v1846, 1.442695
    %v1848 = vpow.pop %v1847
    %v1849 = vmul.f32 %v1821, %v1845
    %v1850 = vadd.f32 %v1849, %v1848
    %1852 = vset.pattern.permute.xlu0 0
    %1853 = vperm.xlu0 %1852, %v1845
    %v1854 = vpop.permute.xlu0 %1853
    %v1856 = vmul.f32 %v1834, %v1854
    %1858 = vset.pattern.permute.xlu0 0
    %1859 = vperm.xlu0 %1858, %v1848
    %v1860 = vpop.permute.xlu0 %1859
    %v1862 = vmul.f32 %v1860, %v1666
    %v1863 = vadd.f32 %v1856, %v1862
    %1865 = vset.pattern.permute.xlu0 0
    %1866 = vperm.xlu0 %1865, %v1850
    %v1867 = vpop.permute.xlu0 %1866
    %v1869 = vrcp.pop %v1867
    %v1870 = vmul.f32 %v1863, %v1869
    %v1871 = vmax.f32 %v1842, %v1469
    %v1872 = vsub.f32 %v1842, %v1871
    %v1873 = vmul.f32 %v1872, 1.442695
    %v1874 = vpow.pop %v1873
    %v1875 = vsub.f32 %v1469, %v1871
    %v1876 = vmul.f32 %v1875, 1.442695
    %v1877 = vpow.pop %v1876
    %v1878 = vmul.f32 %v1850, %v1874
    %v1879 = vadd.f32 %v1878, %v1877
    %1881 = vset.pattern.permute.xlu0 0
    %1882 = vperm.xlu0 %1881, %v1874
    %v1883 = vpop.permute.xlu0 %1882
    %v1885 = vmul.f32 %v1863, %v1883
    %1887 = vset.pattern.permute.xlu0 0
    %1888 = vperm.xlu0 %1887, %v1877
    %v1889 = vpop.permute.xlu0 %1888
    %v1891 = vmul.f32 %v1889, %v1667
    %v1892 = vadd.f32 %v1885, %v1891
    %1894 = vset.pattern.permute.xlu0 0
    %1895 = vperm.xlu0 %1894, %v1879
    %v1896 = vpop.permute.xlu0 %1895
    %v1898 = vrcp.pop %v1896
    %v1899 = vmul.f32 %v1892, %v1898
    %1901 = vset.pattern.permute.xlu0 0
    %1902 = vperm.xlu0 %1901, %v133
    %v1903 = vpop.permute.xlu0 %1902
    %1905 = vset.pattern.permute.xlu0 0
    %1906 = vperm.xlu0 %1905, %v134
    %v1907 = vpop.permute.xlu0 %1906
    %v1909 = vunpack.c.l.s4 269488144
    %v1910 = vunpack.c.0.s8 %v1909
    %v1911 = vlaneseq
    %v1912 = vshrl.u32 %v1911, 7
    %v1913 = vsub.s32 %v1910, %v1912
    %v1914 = vrot.slane %v1903, %v1913
    %v1916 = vunpack.c.l.s4 842150450
    %v1917 = vunpack.c.0.s8 %v1916
    %v1918 = vlaneseq
    %v1919 = vshrl.u32 %v1918, 7
    %v1920 = vsub.s32 %v1917, %v1919
    %v1921 = vrot.slane %v1903, %v1920
    %v1923 = vunpack.c.l.s4 1414812756
    %v1924 = vunpack.c.0.s8 %v1923
    %v1925 = vlaneseq
    %v1926 = vshrl.u32 %v1925, 7
    %v1927 = vsub.s32 %v1924, %v1926
    %v1928 = vrot.slane %v1903, %v1927
    %v1930 = vunpack.c.l.s4 1987475062
    %v1931 = vunpack.c.0.s8 %v1930
    %v1932 = vlaneseq
    %v1933 = vshrl.u32 %v1932, 7
    %v1934 = vsub.s32 %v1931, %v1933
    %v1935 = vrot.slane %v1903, %v1934
    %v1937 = vunpack.c.l.s4 269488144
    %v1938 = vunpack.c.0.s8 %v1937
    %v1939 = vlaneseq
    %v1940 = vshrl.u32 %v1939, 7
    %v1941 = vsub.s32 %v1938, %v1940
    %v1942 = vrot.slane %v1907, %v1941
    %v1944 = vunpack.c.l.s4 842150450
    %v1945 = vunpack.c.0.s8 %v1944
    %v1946 = vlaneseq
    %v1947 = vshrl.u32 %v1946, 7
    %v1948 = vsub.s32 %v1945, %v1947
    %v1949 = vrot.slane %v1907, %v1948
    %v1951 = vunpack.c.l.s4 1414812756
    %v1952 = vunpack.c.0.s8 %v1951
    %v1953 = vlaneseq
    %v1954 = vshrl.u32 %v1953, 7
    %v1955 = vsub.s32 %v1952, %v1954
    %v1956 = vrot.slane %v1907, %v1955
    %v1958 = vunpack.c.l.s4 1987475062
    %v1959 = vunpack.c.0.s8 %v1958
    %v1960 = vlaneseq
    %v1961 = vshrl.u32 %v1960, 7
    %v1962 = vsub.s32 %v1959, %v1961
    %v1963 = vrot.slane %v1907, %v1962
    %v1972 = vmul.f32 %v1696, %v1914
    %v1973 = vmul.f32 %v1725, %v1921
    %v1974 = vmul.f32 %v1754, %v1928
    %v1975 = vmul.f32 %v1783, %v1935
    %v1976 = vmul.f32 %v1812, %v1942
    %v1977 = vmul.f32 %v1841, %v1949
    %v1978 = vmul.f32 %v1870, %v1956
    %v1979 = vmul.f32 %v1899, %v1963
    %v1980 = vld [vmem:[%s13] sm:$0xff]
    %v1981 = vld [vmem:[%s13 + $0x8] sm:$0xff]
    %v1982 = vld [vmem:[%s13 + $0x10] sm:$0xff]
    %v1983 = vld [vmem:[%s13 + $0x18] sm:$0xff]
    %v1984 = vld [vmem:[%s14] sm:$0x1]
    %v1986 = vlaneseq
    %v1987 = vshrl.u32 %v1986, 7
    %v1988 = vsub.s32 0, %v1987
    %v1989 = vrot.slane %v1984, %v1988
    %v1999 = vcombine.low %v1972, %v1973
    %v2000 = vcombine.low %v1974, %v1975
    %v2002 = vunpack.c.l.s4 1983009808
    %v2003 = vunpack.c.0.s8 %v2002
    %v2004 = vlaneseq
    %v2005 = vshrl.u32 %v2004, 7
    %v2006 = vsub.s32 %v2003, %v2005
    %v2007 = vrot.slane %v1999, %v2006
    %v2009 = vunpack.c.l.s4 1983009808
    %v2010 = vunpack.c.0.s8 %v2009
    %v2011 = vlaneseq
    %v2012 = vshrl.u32 %v2011, 7
    %v2013 = vsub.s32 %v2010, %v2012
    %v2014 = vrot.slane %v2000, %v2013
    %v2015 = vcombine.low %v2007, %v2014
    %v2016 = vcombine.low %v1976, %v1977
    %v2017 = vcombine.low %v1978, %v1979
    %v2019 = vunpack.c.l.s4 1983009808
    %v2020 = vunpack.c.0.s8 %v2019
    %v2021 = vlaneseq
    %v2022 = vshrl.u32 %v2021, 7
    %v2023 = vsub.s32 %v2020, %v2022
    %v2024 = vrot.slane %v2016, %v2023
    %v2026 = vunpack.c.l.s4 1983009808
    %v2027 = vunpack.c.0.s8 %v2026
    %v2028 = vlaneseq
    %v2029 = vshrl.u32 %v2028, 7
    %v2030 = vsub.s32 %v2027, %v2029
    %v2031 = vrot.slane %v2017, %v2030
    %v2032 = vcombine.low %v2024, %v2031
    %v2033 = vsel %vm289, %v2015, 0
    %v2035 = vsel %vm289, %v2032, 0
    %2037 = vmatprep.subr.mxu0 0.0
    %2038 = vmatpush1.msra.mxu0 %v1980
    %2039 = vmatprep.subr.mxu0 0.0
    %2040 = vmatpush1.msra.mxu0 %v1981
    %2041 = vmatprep.subr.mxu0 0.0
    %2042 = vmatpush1.msra.mxu0 %v1982
    %2043 = vmatprep.subr.mxu0 0.0
    %2044 = vmatpush1.msra.mxu0 %v1983
    %2045 = vmatprep.subr.mxu0 0.0
    %2046 = vmatpush1.msra.mxu0 0.0
    %2047 = vmatprep.subr.mxu0 0.0
    %2048 = vmatpush1.msra.mxu0 0.0
    %2049 = vmatprep.subr.mxu0 0.0
    %2050 = vmatpush1.msra.mxu0 0.0
    %2051 = vmatprep.subr.mxu0 0.0
    %2052 = vmatpush1.msra.mxu0 0.0
    %2053 = vmatprep.subr.mxu0 0.0
    %2054 = vmatpush1.msra.mxu0 0.0
    %2055 = vmatprep.subr.mxu0 0.0
    %2056 = vmatpush1.msra.mxu0 0.0
    %2057 = vmatprep.subr.mxu0 0.0
    %2058 = vmatpush1.msra.mxu0 0.0
    %2059 = vmatprep.subr.mxu0 0.0
    %2060 = vmatpush1.msra.mxu0 0.0
    %2061 = vmatprep.subr.mxu0 0.0
    %2062 = vmatpush1.msra.mxu0 0.0
    %2063 = vmatprep.subr.mxu0 0.0
    %2064 = vmatpush1.msra.mxu0 0.0
    %2065 = vmatprep.subr.mxu0 0.0
    %2066 = vmatpush1.msra.mxu0 0.0
    %2067 = vmatprep.subr.mxu0 0.0
    %2068 = vmatpush1.msra.mxu0 0.0
    %2069 = vmatprep.subr.mxu0 0.0
    %2070 = vmatpush1.msra.mxu0 0.0
    %2071 = vmatprep.subr.mxu0 0.0
    %2072 = vmatpush1.msra.mxu0 0.0
    %2073 = vmatprep.subr.mxu0 0.0
    %2074 = vmatpush1.msra.mxu0 0.0
    %2075 = vmatprep.subr.mxu0 0.0
    %2076 = vmatpush1.msra.mxu0 0.0
    %2077 = vmatprep.subr.mxu0 0.0
    %2078 = vmatpush1.msra.mxu0 0.0
    %2079 = vmatprep.subr.mxu0 0.0
    %2080 = vmatpush1.msra.mxu0 0.0
    %2081 = vmatprep.subr.mxu0 0.0
    %2082 = vmatpush1.msra.mxu0 0.0
    %2083 = vmatprep.subr.mxu0 0.0
    %2084 = vmatpush1.msra.mxu0 0.0
    %2085 = vmatprep.subr.mxu0 0.0
    %2086 = vmatpush1.msra.mxu0 0.0
    %2087 = vmatprep.subr.mxu0 0.0
    %2088 = vmatpush1.msra.mxu0 0.0
    %2089 = vmatprep.subr.mxu0 0.0
    %2090 = vmatpush1.msra.mxu0 0.0
    %2091 = vmatprep.subr.mxu0 0.0
    %2092 = vmatpush1.msra.mxu0 0.0
    %2093 = vmatprep.subr.mxu0 0.0
    %2094 = vmatpush1.msra.mxu0 0.0
    %2095 = vmatprep.subr.mxu0 0.0
    %2096 = vmatpush1.msra.mxu0 0.0
    %2097 = vmatprep.subr.mxu0 0.0
    %2098 = vmatpush1.msra.mxu0 0.0
    %2099 = vmatprep.subr.mxu0 0.0
    %2100 = vmatpush1.msra.mxu0 0.0
    %2101 = vmatprep.mubr.f32.mxu0 0.0
    %2102 = vmatmul.mubr.f32.gmra.mrb[0].mxu0 %v2033
    %v2103 = vpop.f32.mrb[0].mxu0
    %v2104 = vadd.f32 %v1989, %v2103
    %v2105 = vpop.f32.mrb[0].mxu0
    %2106 = vmatprep.mubr.f32.mxu0 0.0
    %2107 = vmatmul.mubr.f32.gmra.mrb[0].mxu0 %v2035
    %v2108 = vpop.f32.mrb[0].mxu0
    %v2109 = vadd.f32 %v1989, %v2108
    %v2110 = vpop.f32.mrb[0].mxu0
    %2111 = vdwg.mxu0
    %v2112 = vxor.u32 %v2104, 2147483648
    %v2113 = vxor.u32 %v2109, 2147483648
    %v2114 = vmul.f32 %v2112, 1.442695
    %v2115 = vpow.pop %v2114
    %v2116 = vmul.f32 %v2113, 1.442695
    %v2117 = vpow.pop %v2116
    %v2118 = vadd.f32 %v2115, 1.0
    %v2119 = vadd.f32 %v2117, 1.0
    %v2120 = vrcp.pop %v2118
    %v2121 = vmul.f32 1.0, %v2120
    %v2122 = vrcp.pop %v2119
    %v2123 = vmul.f32 1.0, %v2122
    %2124 = vst [vmem:[#allocation12] sm:$0xff] %v2121
    %2125 = vst [vmem:[#allocation12 + $0x8] sm:$0xff] %v2123
    // Predicated region
    $region82: #{tpu_custom_call.1} parent=1 // pred_check
      _
    $region83: #{tpu_custom_call.1} parent=1 // pred_check_branch
      %2127 = sbr.rel (0) target = $region85
    $region84: #{tpu_custom_call.1} parent=1 // pred_region
      %s2129 = ssub.s32 256, 256
      %2130 = vsyncadd [#allocation5], %s2129
      %s2131 = sshll.u32 [#allocation12], 4
      %s2132 = int_to_ptr.vmem [resolvable:$true] %s2131
      %2137 = dma.vmem_to_hbm [thread:$0]  %s2132, 256, %s15, [#allocation5], 128, 128, 8
    $region85: #{tpu_custom_call.1} parent=1 // pred_fallthru
      _
    // Predicated region
    $region86: #{tpu_custom_call.1} parent=1 // pred_check
      _
    $region87: #{tpu_custom_call.1} parent=1 // pred_check_branch
      %2139 = sbr.rel (0) target = $region89
    $region88: #{tpu_custom_call.1} parent=1 // pred_region
      %2140 = dma.done [#allocation5], 256
    $region89: #{tpu_custom_call.1} parent=1 // pred_fallthru
      _
    %2141 = vsyncpa [#allocation4], 1
    %2142 = vsyncpa [#allocation7], 1
    %2143 = vsyncpa [#allocation10], 1
    %2144 = vsyncpa [#allocation5], 1

</llo_original>
